<compile_context>
chip_gen: v6e
topology: v6e:2x2x1
jax: 0.10.0
libtpu: 0.0.40
codegen_flags: <defaults>
</compile_context>

<pallas_src>
import functools

import jax
import jax.numpy as jnp
from jax.experimental import pallas as pl
from jax.experimental.pallas import tpu as pltpu


def mlp_kernel(x_ref, w0_ref, b0_ref, w1_ref, b1_ref,
               w2_ref, b2_ref, w3_ref, b3_ref, o_ref):
    # Cast the f32 activation block to bf16 in-kernel (saves the wrapper-side
    # write+re-read HBM pass). All matmuls run bf16 x bf16 on the MXU with f32
    # accumulation; biases are added in f32; inter-layer activations go back to
    # bf16 to keep vreg pressure low.
    h = x_ref[...].astype(jnp.bfloat16)
    h = (jnp.dot(h, w0_ref[...], preferred_element_type=jnp.float32)
         + b0_ref[...]).astype(jnp.bfloat16)                     # ff
    h = (jnp.dot(h, w1_ref[...], preferred_element_type=jnp.float32)
         + b1_ref[...]).astype(jnp.bfloat16)                     # ff1
    h = (jnp.dot(h, w2_ref[...], preferred_element_type=jnp.float32)
         + b2_ref[...]).astype(jnp.bfloat16)                     # ff2
    o_ref[...] = (jnp.dot(h, w3_ref[...], preferred_element_type=jnp.float32)
                  + b3_ref[...]).astype(o_ref.dtype)             # layer


@functools.partial(jax.jit, static_argnames=("tile_m", "out_dtype"))
def basic_mlp(x, params, *, tile_m=None, out_dtype=jnp.float32):
    """params: 4 pairs (w_t, b); w_t is (in, out) bf16, b is (1, out) f32."""
    (w0, b0), (w1, b1), (w2, b2), (w3, b3) = params
    batch, n = x.shape
    m = w3.shape[1]

    if tile_m is None:
        # Single tile for small batches (no per-step overhead, weights fetched
        # once); 512-row tiles otherwise (amortizes per-step overhead and MXU
        # weight pushes; still tiny in VMEM: 512 x 256 f32 = 512 KiB).
        tile_m = batch if batch <= 512 else 512
    tile_m = min(tile_m, batch)

    grid = (pl.cdiv(batch, tile_m),)   # ragged final tile handled by Pallas

    # Streaming activation / output tiles (double-buffered by default).
    x_spec = pl.BlockSpec((tile_m, n), lambda i: (i, 0))
    out_spec = pl.BlockSpec((tile_m, m), lambda i: (i, 0))

    def resident(shape):
        # Grid-invariant operand: fetched once, single-buffered.
        return pl.BlockSpec(shape, lambda i: (0, 0),
                            pipeline_mode=pl.Buffered(1))

    # Right-size the VMEM budget: only override the compiler default when the
    # kernel actually needs more than the smallest per-chip default (16 MiB).
    out_isize = jnp.dtype(out_dtype).itemsize
    vmem_need = (2 * tile_m * n * x.dtype.itemsize     # x tile, double-buffered
                 + 2 * tile_m * m * out_isize          # out tile, double-buffered
                 + (3 * n * n + n * m) * 2             # bf16 weights, single buf
                 + (3 * n + m) * 4)                    # f32 biases
    vmem_kwargs = {}
    if 2 * vmem_need > 16 * 1024 * 1024:
        vmem_kwargs["vmem_limit_bytes"] = int(min(2 * vmem_need, 56 * 1024 * 1024))

    flops = 2 * batch * (3 * n * n + n * m)
    bytes_accessed = (batch * n * x.dtype.itemsize + batch * m * out_isize
                      + (3 * n * n + n * m) * 2 + (3 * n + m) * 4)
    cost = pl.CostEstimate(flops=flops, transcendentals=0,
                           bytes_accessed=bytes_accessed)

    return pl.pallas_call(
        mlp_kernel,
        out_shape=jax.ShapeDtypeStruct((batch, m), out_dtype),
        grid=grid,
        in_specs=[
            x_spec,
            resident((n, n)), resident((1, n)),   # ff
            resident((n, n)), resident((1, n)),   # ff1
            resident((n, n)), resident((1, n)),   # ff2
            resident((n, m)), resident((1, m)),   # layer
        ],
        out_specs=out_spec,
        compiler_params=pltpu.CompilerParams(
            dimension_semantics=("parallel",),
            **vmem_kwargs,
        ),
        cost_estimate=cost,
    )(x, w0, b0, w1, b1, w2, b2, w3, b3)


def init_linear(key, in_features, out_features):
    """Deterministic init mimicking nn.Linear's U(-1/sqrt(in), 1/sqrt(in)).

    Weight is stored already transposed to (in, out) and cast to bf16 ONCE here
    (persistent bf16 storage -> no per-call weight cast pass). Bias stays f32.
    """
    kw, kb = jax.random.split(key)
    bound = 1.0 / (in_features ** 0.5)
    w_t = jax.random.uniform(kw, (in_features, out_features),
                             dtype=jnp.float32, minval=-bound, maxval=bound)
    b = jax.random.uniform(kb, (1, out_features),
                           dtype=jnp.float32, minval=-bound, maxval=bound)
    return w_t.astype(jnp.bfloat16), b


def reference_mlp(x, params):
    """Plain-JAX reference with the same dtype pipeline as the kernel."""
    h = x.astype(jnp.bfloat16)
    for idx, (w_t, b) in enumerate(params):
        h = jnp.dot(h, w_t, preferred_element_type=jnp.float32) + b
        if idx != len(params) - 1:
            h = h.astype(jnp.bfloat16)
    return h


if __name__ == "__main__":
    # Small shapes consistent with the module: hidden width n=256, output m=128.
    batch, n, m = 256, 256, 128

    key = jax.random.PRNGKey(0)
    k_x, k0, k1, k2, k3 = jax.random.split(key, 5)

    x = jax.random.normal(k_x, (batch, n), dtype=jnp.float32)
    params = [
        init_linear(k0, n, n),   # ff
        init_linear(k1, n, n),   # ff1
        init_linear(k2, n, n),   # ff2
        init_linear(k3, n, m),   # layer
    ]

    # 1) Default path: single batch tile (latency-optimal for small batches).
    out = jax.block_until_ready(basic_mlp(x, params))
    ref = reference_mlp(x, params)
    assert out.shape == (batch, m) and out.dtype == jnp.float32
    assert jnp.allclose(out, ref, atol=2e-2, rtol=2e-2)   # bf16 operands

    # 2) Ragged multi-step grid (batch not a multiple of tile_m): exercises the
    #    pipelined path with a masked final tile and no wrapper-side padding.
    x_r = x[:200]
    out_r = jax.block_until_ready(basic_mlp(x_r, params, tile_m=128))
    ref_r = reference_mlp(x_r, params)
    assert out_r.shape == (200, m)
    assert jnp.allclose(out_r, ref_r, atol=2e-2, rtol=2e-2)

    # 3) bf16 output path (halves output writeback when downstream accepts it).
    out_bf = jax.block_until_ready(basic_mlp(x, params, out_dtype=jnp.bfloat16))
    assert out_bf.dtype == jnp.bfloat16
    assert jnp.allclose(out_bf.astype(jnp.float32), ref, atol=5e-2, rtol=5e-2)

    print("KERNEL_OK")
</pallas_src>

<mosaic_0001>
module attributes {stable_mosaic.version = 11 : i64} {
  func.func @mlp_kernel(%arg0: i32, %arg1: memref<256x256xf32, #tpu.memory_space<vmem>>, %arg2: memref<256x256xbf16, #tpu.memory_space<vmem>>, %arg3: memref<1x256xf32, #tpu.memory_space<vmem>>, %arg4: memref<256x256xbf16, #tpu.memory_space<vmem>>, %arg5: memref<1x256xf32, #tpu.memory_space<vmem>>, %arg6: memref<256x256xbf16, #tpu.memory_space<vmem>>, %arg7: memref<1x256xf32, #tpu.memory_space<vmem>>, %arg8: memref<256x128xbf16, #tpu.memory_space<vmem>>, %arg9: memref<1x128xf32, #tpu.memory_space<vmem>>, %arg10: memref<256x128xf32, #tpu.memory_space<vmem>>) attributes {dimension_semantics = [#tpu.dimension_semantics<parallel>], iteration_bounds = array<i64: 1>, scalar_prefetch = 0 : i64, scratch_operands = 0 : i64, tpu.core_type = #tpu.core_type<tc>, window_params = [{transform_indices = @transform_0, window_bounds = array<i64: 256, 256>}, {pipeline_mode = #tpu.pipeline_mode<synchronous>, transform_indices = @transform_1, window_bounds = array<i64: 256, 256>}, {pipeline_mode = #tpu.pipeline_mode<synchronous>, transform_indices = @transform_2, window_bounds = array<i64: 1, 256>}, {pipeline_mode = #tpu.pipeline_mode<synchronous>, transform_indices = @transform_3, window_bounds = array<i64: 256, 256>}, {pipeline_mode = #tpu.pipeline_mode<synchronous>, transform_indices = @transform_4, window_bounds = array<i64: 1, 256>}, {pipeline_mode = #tpu.pipeline_mode<synchronous>, transform_indices = @transform_5, window_bounds = array<i64: 256, 256>}, {pipeline_mode = #tpu.pipeline_mode<synchronous>, transform_indices = @transform_6, window_bounds = array<i64: 1, 256>}, {pipeline_mode = #tpu.pipeline_mode<synchronous>, transform_indices = @transform_7, window_bounds = array<i64: 256, 128>}, {pipeline_mode = #tpu.pipeline_mode<synchronous>, transform_indices = @transform_8, window_bounds = array<i64: 1, 128>}, {transform_indices = @transform_9, window_bounds = array<i64: 256, 128>}]} {
    %c0 = arith.constant 0 : index
    %c0_0 = arith.constant 0 : index
    %0 = vector.load %arg1[%c0, %c0_0] : memref<256x256xf32, #tpu.memory_space<vmem>>, vector<256x256xf32>
    %1 = arith.truncf %0 : vector<256x256xf32> to vector<256x256xbf16>
    %c0_1 = arith.constant 0 : index
    %c0_2 = arith.constant 0 : index
    %2 = vector.load %arg2[%c0_1, %c0_2] : memref<256x256xbf16, #tpu.memory_space<vmem>>, vector<256x256xbf16>
    %cst = arith.constant dense<0.000000e+00> : vector<256x256xf32>
    %3 = tpu.matmul %1, %2, %cst {dimension_numbers = #tpu.dot_dimension_numbers<[1], [0], [0], [1], [0, 0, 1, 1], [], []>} : vector<256x256xbf16>, vector<256x256xbf16>, vector<256x256xf32> -> vector<256x256xf32>
    %c0_3 = arith.constant 0 : index
    %c0_4 = arith.constant 0 : index
    %4 = vector.load %arg3[%c0_3, %c0_4] : memref<1x256xf32, #tpu.memory_space<vmem>>, vector<1x256xf32>
    %5 = vector.broadcast %4 : vector<1x256xf32> to vector<256x256xf32>
    %6 = arith.addf %3, %5 : vector<256x256xf32>
    %7 = arith.truncf %6 : vector<256x256xf32> to vector<256x256xbf16>
    %c0_5 = arith.constant 0 : index
    %c0_6 = arith.constant 0 : index
    %8 = vector.load %arg4[%c0_5, %c0_6] : memref<256x256xbf16, #tpu.memory_space<vmem>>, vector<256x256xbf16>
    %cst_7 = arith.constant dense<0.000000e+00> : vector<256x256xf32>
    %9 = tpu.matmul %7, %8, %cst_7 {dimension_numbers = #tpu.dot_dimension_numbers<[1], [0], [0], [1], [0, 0, 1, 1], [], []>} : vector<256x256xbf16>, vector<256x256xbf16>, vector<256x256xf32> -> vector<256x256xf32>
    %c0_8 = arith.constant 0 : index
    %c0_9 = arith.constant 0 : index
    %10 = vector.load %arg5[%c0_8, %c0_9] : memref<1x256xf32, #tpu.memory_space<vmem>>, vector<1x256xf32>
    %11 = vector.broadcast %10 : vector<1x256xf32> to vector<256x256xf32>
    %12 = arith.addf %9, %11 : vector<256x256xf32>
    %13 = arith.truncf %12 : vector<256x256xf32> to vector<256x256xbf16>
    %c0_10 = arith.constant 0 : index
    %c0_11 = arith.constant 0 : index
    %14 = vector.load %arg6[%c0_10, %c0_11] : memref<256x256xbf16, #tpu.memory_space<vmem>>, vector<256x256xbf16>
    %cst_12 = arith.constant dense<0.000000e+00> : vector<256x256xf32>
    %15 = tpu.matmul %13, %14, %cst_12 {dimension_numbers = #tpu.dot_dimension_numbers<[1], [0], [0], [1], [0, 0, 1, 1], [], []>} : vector<256x256xbf16>, vector<256x256xbf16>, vector<256x256xf32> -> vector<256x256xf32>
    %c0_13 = arith.constant 0 : index
    %c0_14 = arith.constant 0 : index
    %16 = vector.load %arg7[%c0_13, %c0_14] : memref<1x256xf32, #tpu.memory_space<vmem>>, vector<1x256xf32>
    %17 = vector.broadcast %16 : vector<1x256xf32> to vector<256x256xf32>
    %18 = arith.addf %15, %17 : vector<256x256xf32>
    %19 = arith.truncf %18 : vector<256x256xf32> to vector<256x256xbf16>
    %c0_15 = arith.constant 0 : index
    %c0_16 = arith.constant 0 : index
    %20 = vector.load %arg8[%c0_15, %c0_16] : memref<256x128xbf16, #tpu.memory_space<vmem>>, vector<256x128xbf16>
    %cst_17 = arith.constant dense<0.000000e+00> : vector<256x128xf32>
    %21 = tpu.matmul %19, %20, %cst_17 {dimension_numbers = #tpu.dot_dimension_numbers<[1], [0], [0], [1], [0, 0, 1, 1], [], []>} : vector<256x256xbf16>, vector<256x128xbf16>, vector<256x128xf32> -> vector<256x128xf32>
    %c0_18 = arith.constant 0 : index
    %c0_19 = arith.constant 0 : index
    %22 = vector.load %arg9[%c0_18, %c0_19] : memref<1x128xf32, #tpu.memory_space<vmem>>, vector<1x128xf32>
    %23 = vector.broadcast %22 : vector<1x128xf32> to vector<256x128xf32>
    %24 = arith.addf %21, %23 : vector<256x128xf32>
    %c0_20 = arith.constant 0 : index
    %c0_21 = arith.constant 0 : index
    %25 = vector.load %arg10[%c0_20, %c0_21] : memref<256x128xf32, #tpu.memory_space<vmem>>, vector<256x128xf32>
    tpu.vector_store %arg10[%c0_20, %c0_21], %24 {strides = array<i32>} : memref<256x128xf32, #tpu.memory_space<vmem>>, vector<256x128xf32>,
    return
  }
  func.func @transform_0(%arg0: i32) -> (i32, i32) {
    %c0_i32 = arith.constant 0 : i32
    %c0_i32_0 = arith.constant 0 : i32
    return %arg0, %c0_i32 : i32, i32
  }
  func.func @transform_1(%arg0: i32) -> (i32, i32) {
    %c0_i32 = arith.constant 0 : i32
    %c0_i32_0 = arith.constant 0 : i32
    %c0_i32_1 = arith.constant 0 : i32
    return %c0_i32, %c0_i32_0 : i32, i32
  }
  func.func @transform_2(%arg0: i32) -> (i32, i32) {
    %c0_i32 = arith.constant 0 : i32
    %c0_i32_0 = arith.constant 0 : i32
    %c0_i32_1 = arith.constant 0 : i32
    return %c0_i32, %c0_i32_0 : i32, i32
  }
  func.func @transform_3(%arg0: i32) -> (i32, i32) {
    %c0_i32 = arith.constant 0 : i32
    %c0_i32_0 = arith.constant 0 : i32
    %c0_i32_1 = arith.constant 0 : i32
    return %c0_i32, %c0_i32_0 : i32, i32
  }
  func.func @transform_4(%arg0: i32) -> (i32, i32) {
    %c0_i32 = arith.constant 0 : i32
    %c0_i32_0 = arith.constant 0 : i32
    %c0_i32_1 = arith.constant 0 : i32
    return %c0_i32, %c0_i32_0 : i32, i32
  }
  func.func @transform_5(%arg0: i32) -> (i32, i32) {
    %c0_i32 = arith.constant 0 : i32
    %c0_i32_0 = arith.constant 0 : i32
    %c0_i32_1 = arith.constant 0 : i32
    return %c0_i32, %c0_i32_0 : i32, i32
  }
  func.func @transform_6(%arg0: i32) -> (i32, i32) {
    %c0_i32 = arith.constant 0 : i32
    %c0_i32_0 = arith.constant 0 : i32
    %c0_i32_1 = arith.constant 0 : i32
    return %c0_i32, %c0_i32_0 : i32, i32
  }
  func.func @transform_7(%arg0: i32) -> (i32, i32) {
    %c0_i32 = arith.constant 0 : i32
    %c0_i32_0 = arith.constant 0 : i32
    %c0_i32_1 = arith.constant 0 : i32
    return %c0_i32, %c0_i32_0 : i32, i32
  }
  func.func @transform_8(%arg0: i32) -> (i32, i32) {
    %c0_i32 = arith.constant 0 : i32
    %c0_i32_0 = arith.constant 0 : i32
    %c0_i32_1 = arith.constant 0 : i32
    return %c0_i32, %c0_i32_0 : i32, i32
  }
  func.func @transform_9(%arg0: i32) -> (i32, i32) {
    %c0_i32 = arith.constant 0 : i32
    %c0_i32_0 = arith.constant 0 : i32
    return %arg0, %c0_i32 : i32, i32
  }
}

</mosaic_0001>

<llo_original>
// kernel: basic_mlp.1
$region0: #{basic_mlp.1}
  #allocation0 [shape = 'u32[]', space=smem, size = 0x4, offset = 0x4, fixed_abs, tag = 'smem constant byte address 0x4 - core index']
  #allocation1 [shape = 'u32[144,128]{1,0:T(1,128)}', space=vmem, size = 0x12000, scoped, tag = 'internal scratch']
  %s0 = inlined_call_operand.hbm [shape: f32[256,256], index: 0, kind: input, shape index: {}]
  %s1 = inlined_call_operand.hbm [shape: bf16[256,256], index: 1, kind: input, shape index: {}]
  %s2 = inlined_call_operand.vmem [shape: f32[1,256], index: 2, kind: input, shape index: {}]
  %s3 = inlined_call_operand.hbm [shape: bf16[256,256], index: 3, kind: input, shape index: {}]
  %s4 = inlined_call_operand.vmem [shape: f32[1,256], index: 4, kind: input, shape index: {}]
  %s5 = inlined_call_operand.hbm [shape: bf16[256,256], index: 5, kind: input, shape index: {}]
  %s6 = inlined_call_operand.vmem [shape: f32[1,256], index: 6, kind: input, shape index: {}]
  %s7 = inlined_call_operand.hbm [shape: bf16[256,128], index: 7, kind: input, shape index: {}]
  %s8 = inlined_call_operand.vmem [shape: f32[1,128], index: 8, kind: input, shape index: {}]
  %s9 = inlined_call_operand.hbm [shape: f32[256,128], index: 9, kind: output, shape index: {}]
  %s10 = sld [smem:[#allocation0]]
  $region66: #{basic_mlp.1} parent=0
    _
  %s12 = ssub.s32 1, %s10
  %s13 = scalar_select 0, %s12, %s10
  $region1: #{basic_mlp.1} parent=0
    #allocation2 [shape = 'u8[262144]{0}', space=vmem, size = 0x40000, scoped, tag = 'input window, operand 0, single buffered']
    #allocation3 [shape = 's32[1]{0}', space=sflag, size = 0x4, scoped, tag = 'scoped memory for basic_mlp.1']
    #allocation4 [shape = 's32[1]{0}', space=sflag, size = 0x4, scoped, tag = 'scoped memory for basic_mlp.1']
    #allocation5 [shape = 'u8[131072]{0}', space=vmem, size = 0x20000, scoped, tag = 'input window, operand 1, single buffered']
    #allocation6 [shape = 's32[1]{0}', space=sflag, size = 0x4, scoped, tag = 'scoped memory for basic_mlp.1']
    #allocation7 [shape = 'u8[131072]{0}', space=vmem, size = 0x20000, scoped, tag = 'input window, operand 3, single buffered']
    #allocation8 [shape = 'u8[131072]{0}', space=vmem, size = 0x20000, scoped, tag = 'input window, operand 5, single buffered']
    #allocation9 [shape = 's32[1]{0}', space=sflag, size = 0x4, scoped, tag = 'scoped memory for basic_mlp.1']
    #allocation10 [shape = 'u8[65536]{0}', space=vmem, size = 0x10000, scoped, tag = 'input window, operand 7, single buffered']
    #allocation11 [shape = 'u8[131072]{0}', space=vmem, size = 0x20000, scoped, tag = 'output window, operand 0, single buffered']
    %14 = vsyncpa [#allocation3], 0
    %15 = vsyncpa [#allocation6], 0
    %16 = vsyncpa [#allocation9], 0
    %17 = vsyncpa [#allocation4], 0
    // Predicated region
    $region2: #{basic_mlp.1} parent=1 // pred_check
      _
    $region3: #{basic_mlp.1} parent=1 // pred_check_branch
      %19 = sbr.rel (0) target = $region5
    $region4: #{basic_mlp.1} parent=1 // pred_region
      %s21 = ssub.s32 8192, 8192
      %22 = vsyncadd [#allocation3], %s21
      %s23 = sshll.u32 [#allocation2], 4
      %s24 = int_to_ptr.vmem [resolvable:$true] %s23
      %29 = dma.hbm_to_vmem [thread:$0]  %s0, 8192, %s24, [#allocation3], 256, 256, 16
    $region5: #{basic_mlp.1} parent=1 // pred_fallthru
      _
    // Predicated region
    $region6: #{basic_mlp.1} parent=1 // pred_check
      _
    $region7: #{basic_mlp.1} parent=1 // pred_check_branch
      %31 = sbr.rel (0) target = $region9
    $region8: #{basic_mlp.1} parent=1 // pred_region
      %s33 = ssub.s32 4096, 4096
      %34 = vsyncadd [#allocation6], %s33
      %s35 = sshll.u32 [#allocation5], 4
      %s36 = int_to_ptr.vmem [resolvable:$true] %s35
      %41 = dma.hbm_to_vmem [thread:$0]  %s1, 4096, %s36, [#allocation6], 128, 128, 8
    $region9: #{basic_mlp.1} parent=1 // pred_fallthru
      _
    // Predicated region
    $region10: #{basic_mlp.1} parent=1 // pred_check
      _
    $region11: #{basic_mlp.1} parent=1 // pred_check_branch
      %43 = sbr.rel (0) target = $region13
    $region12: #{basic_mlp.1} parent=1 // pred_region
      _
    $region13: #{basic_mlp.1} parent=1 // pred_fallthru
      _
    // Predicated region
    $region14: #{basic_mlp.1} parent=1 // pred_check
      _
    $region15: #{basic_mlp.1} parent=1 // pred_check_branch
      %45 = sbr.rel (0) target = $region17
    $region16: #{basic_mlp.1} parent=1 // pred_region
      %s47 = ssub.s32 4096, 4096
      %48 = vsyncadd [#allocation6], %s47
      %s49 = sshll.u32 [#allocation7], 4
      %s50 = int_to_ptr.vmem [resolvable:$true] %s49
      %55 = dma.hbm_to_vmem [thread:$0]  %s3, 4096, %s50, [#allocation6], 128, 128, 8
    $region17: #{basic_mlp.1} parent=1 // pred_fallthru
      _
    // Predicated region
    $region18: #{basic_mlp.1} parent=1 // pred_check
      _
    $region19: #{basic_mlp.1} parent=1 // pred_check_branch
      %57 = sbr.rel (0) target = $region21
    $region20: #{basic_mlp.1} parent=1 // pred_region
      _
    $region21: #{basic_mlp.1} parent=1 // pred_fallthru
      _
    // Predicated region
    $region22: #{basic_mlp.1} parent=1 // pred_check
      _
    $region23: #{basic_mlp.1} parent=1 // pred_check_branch
      %59 = sbr.rel (0) target = $region25
    $region24: #{basic_mlp.1} parent=1 // pred_region
      %s61 = ssub.s32 4096, 4096
      %62 = vsyncadd [#allocation9], %s61
      %s63 = sshll.u32 [#allocation8], 4
      %s64 = int_to_ptr.vmem [resolvable:$true] %s63
      %69 = dma.hbm_to_vmem [thread:$0]  %s5, 4096, %s64, [#allocation9], 128, 128, 8
    $region25: #{basic_mlp.1} parent=1 // pred_fallthru
      _
    // Predicated region
    $region26: #{basic_mlp.1} parent=1 // pred_check
      _
    $region27: #{basic_mlp.1} parent=1 // pred_check_branch
      %71 = sbr.rel (0) target = $region29
    $region28: #{basic_mlp.1} parent=1 // pred_region
      _
    $region29: #{basic_mlp.1} parent=1 // pred_fallthru
      _
    // Predicated region
    $region30: #{basic_mlp.1} parent=1 // pred_check
      _
    $region31: #{basic_mlp.1} parent=1 // pred_check_branch
      %73 = sbr.rel (0) target = $region33
    $region32: #{basic_mlp.1} parent=1 // pred_region
      %s75 = ssub.s32 2048, 2048
      %76 = vsyncadd [#allocation9], %s75
      %s77 = sshll.u32 [#allocation10], 4
      %s78 = int_to_ptr.vmem [resolvable:$true] %s77
      %83 = dma.hbm_to_vmem [thread:$0]  %s7, 2048, %s78, [#allocation9], 64, 64, 4
    $region33: #{basic_mlp.1} parent=1 // pred_fallthru
      _
    // Predicated region
    $region34: #{basic_mlp.1} parent=1 // pred_check
      _
    $region35: #{basic_mlp.1} parent=1 // pred_check_branch
      %85 = sbr.rel (0) target = $region37
    $region36: #{basic_mlp.1} parent=1 // pred_region
      _
    $region37: #{basic_mlp.1} parent=1 // pred_fallthru
      _
    // Predicated region
    $region38: #{basic_mlp.1} parent=1 // pred_check
      _
    $region39: #{basic_mlp.1} parent=1 // pred_check_branch
      %87 = sbr.rel (0) target = $region41
    $region40: #{basic_mlp.1} parent=1 // pred_region
      %88 = dma.done [#allocation3], 8192
    $region41: #{basic_mlp.1} parent=1 // pred_fallthru
      _
    // Predicated region
    $region42: #{basic_mlp.1} parent=1 // pred_check
      _
    $region43: #{basic_mlp.1} parent=1 // pred_check_branch
      %90 = sbr.rel (0) target = $region45
    $region44: #{basic_mlp.1} parent=1 // pred_region
      %91 = dma.done [#allocation6], 4096
    $region45: #{basic_mlp.1} parent=1 // pred_fallthru
      _
    // Predicated region
    $region46: #{basic_mlp.1} parent=1 // pred_check
      _
    $region47: #{basic_mlp.1} parent=1 // pred_check_branch
      %93 = sbr.rel (0) target = $region49
    $region48: #{basic_mlp.1} parent=1 // pred_region
      %94 = dma.done [#allocation6], 4096
    $region49: #{basic_mlp.1} parent=1 // pred_fallthru
      _
    // Predicated region
    $region50: #{basic_mlp.1} parent=1 // pred_check
      _
    $region51: #{basic_mlp.1} parent=1 // pred_check_branch
      %96 = sbr.rel (0) target = $region53
    $region52: #{basic_mlp.1} parent=1 // pred_region
      %97 = dma.done [#allocation9], 4096
    $region53: #{basic_mlp.1} parent=1 // pred_fallthru
      _
    // Predicated region
    $region54: #{basic_mlp.1} parent=1 // pred_check
      _
    $region55: #{basic_mlp.1} parent=1 // pred_check_branch
      %99 = sbr.rel (0) target = $region57
    $region56: #{basic_mlp.1} parent=1 // pred_region
      %100 = dma.done [#allocation9], 2048
    $region57: #{basic_mlp.1} parent=1 // pred_fallthru
      _
    %v102 = vld [vmem:[#allocation2] sm:$0xff]
    %v103 = vld [vmem:[#allocation2 + $0x8] sm:$0xff]
    %v104 = vld [vmem:[#allocation2 + $0x10] sm:$0xff]
    %v105 = vld [vmem:[#allocation2 + $0x18] sm:$0xff]
    %v106 = vld [vmem:[#allocation2 + $0x20] sm:$0xff]
    %v107 = vld [vmem:[#allocation2 + $0x28] sm:$0xff]
    %v108 = vld [vmem:[#allocation2 + $0x30] sm:$0xff]
    %v109 = vld [vmem:[#allocation2 + $0x38] sm:$0xff]
    %v110 = vld [vmem:[#allocation2 + $0x40] sm:$0xff]
    %v111 = vld [vmem:[#allocation2 + $0x48] sm:$0xff]
    %v112 = vld [vmem:[#allocation2 + $0x50] sm:$0xff]
    %v113 = vld [vmem:[#allocation2 + $0x58] sm:$0xff]
    %v114 = vld [vmem:[#allocation2 + $0x60] sm:$0xff]
    %v115 = vld [vmem:[#allocation2 + $0x68] sm:$0xff]
    %v116 = vld [vmem:[#allocation2 + $0x70] sm:$0xff]
    %v117 = vld [vmem:[#allocation2 + $0x78] sm:$0xff]
    %v118 = vld [vmem:[#allocation2 + $0x80] sm:$0xff]
    %v119 = vld [vmem:[#allocation2 + $0x88] sm:$0xff]
    %v120 = vld [vmem:[#allocation2 + $0x90] sm:$0xff]
    %v121 = vld [vmem:[#allocation2 + $0x98] sm:$0xff]
    %v122 = vld [vmem:[#allocation2 + $0xa0] sm:$0xff]
    %v123 = vld [vmem:[#allocation2 + $0xa8] sm:$0xff]
    %v124 = vld [vmem:[#allocation2 + $0xb0] sm:$0xff]
    %v125 = vld [vmem:[#allocation2 + $0xb8] sm:$0xff]
    %v126 = vld [vmem:[#allocation2 + $0xc0] sm:$0xff]
    %v127 = vld [vmem:[#allocation2 + $0xc8] sm:$0xff]
    %v128 = vld [vmem:[#allocation2 + $0xd0] sm:$0xff]
    %v129 = vld [vmem:[#allocation2 + $0xd8] sm:$0xff]
    %v130 = vld [vmem:[#allocation2 + $0xe0] sm:$0xff]
    %v131 = vld [vmem:[#allocation2 + $0xe8] sm:$0xff]
    %v132 = vld [vmem:[#allocation2 + $0xf0] sm:$0xff]
    %v133 = vld [vmem:[#allocation2 + $0xf8] sm:$0xff]
    %v134 = vld [vmem:[#allocation2 + $0x100] sm:$0xff]
    %v135 = vld [vmem:[#allocation2 + $0x108] sm:$0xff]
    %v136 = vld [vmem:[#allocation2 + $0x110] sm:$0xff]
    %v137 = vld [vmem:[#allocation2 + $0x118] sm:$0xff]
    %v138 = vld [vmem:[#allocation2 + $0x120] sm:$0xff]
    %v139 = vld [vmem:[#allocation2 + $0x128] sm:$0xff]
    %v140 = vld [vmem:[#allocation2 + $0x130] sm:$0xff]
    %v141 = vld [vmem:[#allocation2 + $0x138] sm:$0xff]
    %v142 = vld [vmem:[#allocation2 + $0x140] sm:$0xff]
    %v143 = vld [vmem:[#allocation2 + $0x148] sm:$0xff]
    %v144 = vld [vmem:[#allocation2 + $0x150] sm:$0xff]
    %v145 = vld [vmem:[#allocation2 + $0x158] sm:$0xff]
    %v146 = vld [vmem:[#allocation2 + $0x160] sm:$0xff]
    %v147 = vld [vmem:[#allocation2 + $0x168] sm:$0xff]
    %v148 = vld [vmem:[#allocation2 + $0x170] sm:$0xff]
    %v149 = vld [vmem:[#allocation2 + $0x178] sm:$0xff]
    %v150 = vld [vmem:[#allocation2 + $0x180] sm:$0xff]
    %v151 = vld [vmem:[#allocation2 + $0x188] sm:$0xff]
    %v152 = vld [vmem:[#allocation2 + $0x190] sm:$0xff]
    %v153 = vld [vmem:[#allocation2 + $0x198] sm:$0xff]
    %v154 = vld [vmem:[#allocation2 + $0x1a0] sm:$0xff]
    %v155 = vld [vmem:[#allocation2 + $0x1a8] sm:$0xff]
    %v156 = vld [vmem:[#allocation2 + $0x1b0] sm:$0xff]
    %v157 = vld [vmem:[#allocation2 + $0x1b8] sm:$0xff]
    %v158 = vld [vmem:[#allocation2 + $0x1c0] sm:$0xff]
    %v159 = vld [vmem:[#allocation2 + $0x1c8] sm:$0xff]
    %v160 = vld [vmem:[#allocation2 + $0x1d0] sm:$0xff]
    %v161 = vld [vmem:[#allocation2 + $0x1d8] sm:$0xff]
    %v162 = vld [vmem:[#allocation2 + $0x1e0] sm:$0xff]
    %v163 = vld [vmem:[#allocation2 + $0x1e8] sm:$0xff]
    %v164 = vld [vmem:[#allocation2 + $0x1f0] sm:$0xff]
    %v165 = vld [vmem:[#allocation2 + $0x1f8] sm:$0xff]
    %v166 = vpack.c.bf16 %v104, %v102
    %v167 = vpack.c.bf16 %v105, %v103
    %v168 = vpack.c.bf16 %v108, %v106
    %v169 = vpack.c.bf16 %v109, %v107
    %v170 = vpack.c.bf16 %v112, %v110
    %v171 = vpack.c.bf16 %v113, %v111
    %v172 = vpack.c.bf16 %v116, %v114
    %v173 = vpack.c.bf16 %v117, %v115
    %v174 = vpack.c.bf16 %v120, %v118
    %v175 = vpack.c.bf16 %v121, %v119
    %v176 = vpack.c.bf16 %v124, %v122
    %v177 = vpack.c.bf16 %v125, %v123
    %v178 = vpack.c.bf16 %v128, %v126
    %v179 = vpack.c.bf16 %v129, %v127
    %v180 = vpack.c.bf16 %v132, %v130
    %v181 = vpack.c.bf16 %v133, %v131
    %v182 = vpack.c.bf16 %v136, %v134
    %v183 = vpack.c.bf16 %v137, %v135
    %v184 = vpack.c.bf16 %v140, %v138
    %v185 = vpack.c.bf16 %v141, %v139
    %v186 = vpack.c.bf16 %v144, %v142
    %v187 = vpack.c.bf16 %v145, %v143
    %v188 = vpack.c.bf16 %v148, %v146
    %v189 = vpack.c.bf16 %v149, %v147
    %v190 = vpack.c.bf16 %v152, %v150
    %v191 = vpack.c.bf16 %v153, %v151
    %v192 = vpack.c.bf16 %v156, %v154
    %v193 = vpack.c.bf16 %v157, %v155
    %v194 = vpack.c.bf16 %v160, %v158
    %v195 = vpack.c.bf16 %v161, %v159
    %v196 = vpack.c.bf16 %v164, %v162
    %v197 = vpack.c.bf16 %v165, %v163
    %v198 = vld [vmem:[#allocation5] sm:$0xff]
    %v199 = vld [vmem:[#allocation5 + $0x8] sm:$0xff]
    %v200 = vld [vmem:[#allocation5 + $0x10] sm:$0xff]
    %v201 = vld [vmem:[#allocation5 + $0x18] sm:$0xff]
    %v202 = vld [vmem:[#allocation5 + $0x20] sm:$0xff]
    %v203 = vld [vmem:[#allocation5 + $0x28] sm:$0xff]
    %v204 = vld [vmem:[#allocation5 + $0x30] sm:$0xff]
    %v205 = vld [vmem:[#allocation5 + $0x38] sm:$0xff]
    %v206 = vld [vmem:[#allocation5 + $0x40] sm:$0xff]
    %v207 = vld [vmem:[#allocation5 + $0x48] sm:$0xff]
    %v208 = vld [vmem:[#allocation5 + $0x50] sm:$0xff]
    %v209 = vld [vmem:[#allocation5 + $0x58] sm:$0xff]
    %v210 = vld [vmem:[#allocation5 + $0x60] sm:$0xff]
    %v211 = vld [vmem:[#allocation5 + $0x68] sm:$0xff]
    %v212 = vld [vmem:[#allocation5 + $0x70] sm:$0xff]
    %v213 = vld [vmem:[#allocation5 + $0x78] sm:$0xff]
    %v214 = vld [vmem:[#allocation5 + $0x80] sm:$0xff]
    %v215 = vld [vmem:[#allocation5 + $0x88] sm:$0xff]
    %v216 = vld [vmem:[#allocation5 + $0x90] sm:$0xff]
    %v217 = vld [vmem:[#allocation5 + $0x98] sm:$0xff]
    %v218 = vld [vmem:[#allocation5 + $0xa0] sm:$0xff]
    %v219 = vld [vmem:[#allocation5 + $0xa8] sm:$0xff]
    %v220 = vld [vmem:[#allocation5 + $0xb0] sm:$0xff]
    %v221 = vld [vmem:[#allocation5 + $0xb8] sm:$0xff]
    %v222 = vld [vmem:[#allocation5 + $0xc0] sm:$0xff]
    %v223 = vld [vmem:[#allocation5 + $0xc8] sm:$0xff]
    %v224 = vld [vmem:[#allocation5 + $0xd0] sm:$0xff]
    %v225 = vld [vmem:[#allocation5 + $0xd8] sm:$0xff]
    %v226 = vld [vmem:[#allocation5 + $0xe0] sm:$0xff]
    %v227 = vld [vmem:[#allocation5 + $0xe8] sm:$0xff]
    %v228 = vld [vmem:[#allocation5 + $0xf0] sm:$0xff]
    %v229 = vld [vmem:[#allocation5 + $0xf8] sm:$0xff]
    %v230 = vld [vmem:[%s2] sm:$0x3]
    %v232 = vlaneseq
    %v233 = vshrl.u32 %v232, 7
    %v234 = vsub.s32 0, %v233
    %v235 = vrot.slane %v230, %v234
    %v236 = vlaneseq
    %v237 = vshrl.u32 %v236, 7
    %v238 = vsub.s32 1, %v237
    %v239 = vrot.slane %v230, %v238
    %v274 = vunpack.c.l.b16 %v198
    %v275 = vunpack.c.h.b16 %v198
    %v276 = vunpack.c.l.b16 %v199
    %v277 = vunpack.c.h.b16 %v199
    %v278 = vunpack.c.l.b16 %v200
    %v279 = vunpack.c.h.b16 %v200
    %v280 = vunpack.c.l.b16 %v201
    %v281 = vunpack.c.h.b16 %v201
    %v282 = vunpack.c.l.b16 %v202
    %v283 = vunpack.c.h.b16 %v202
    %v284 = vunpack.c.l.b16 %v203
    %v285 = vunpack.c.h.b16 %v203
    %v286 = vunpack.c.l.b16 %v204
    %v287 = vunpack.c.h.b16 %v204
    %v288 = vunpack.c.l.b16 %v205
    %v289 = vunpack.c.h.b16 %v205
    %v290 = vunpack.c.l.b16 %v206
    %v291 = vunpack.c.h.b16 %v206
    %v292 = vunpack.c.l.b16 %v207
    %v293 = vunpack.c.h.b16 %v207
    %v294 = vunpack.c.l.b16 %v208
    %v295 = vunpack.c.h.b16 %v208
    %v296 = vunpack.c.l.b16 %v209
    %v297 = vunpack.c.h.b16 %v209
    %v298 = vunpack.c.l.b16 %v210
    %v299 = vunpack.c.h.b16 %v210
    %v300 = vunpack.c.l.b16 %v211
    %v301 = vunpack.c.h.b16 %v211
    %v302 = vunpack.c.l.b16 %v212
    %v303 = vunpack.c.h.b16 %v212
    %v304 = vunpack.c.l.b16 %v213
    %v305 = vunpack.c.h.b16 %v213
    %v306 = vunpack.c.l.b16 %v214
    %v307 = vunpack.c.h.b16 %v214
    %v308 = vunpack.c.l.b16 %v215
    %v309 = vunpack.c.h.b16 %v215
    %v310 = vunpack.c.l.b16 %v216
    %v311 = vunpack.c.h.b16 %v216
    %v312 = vunpack.c.l.b16 %v217
    %v313 = vunpack.c.h.b16 %v217
    %v314 = vunpack.c.l.b16 %v218
    %v315 = vunpack.c.h.b16 %v218
    %v316 = vunpack.c.l.b16 %v219
    %v317 = vunpack.c.h.b16 %v219
    %v318 = vunpack.c.l.b16 %v220
    %v319 = vunpack.c.h.b16 %v220
    %v320 = vunpack.c.l.b16 %v221
    %v321 = vunpack.c.h.b16 %v221
    %v322 = vunpack.c.l.b16 %v222
    %v323 = vunpack.c.h.b16 %v222
    %v324 = vunpack.c.l.b16 %v223
    %v325 = vunpack.c.h.b16 %v223
    %v326 = vunpack.c.l.b16 %v224
    %v327 = vunpack.c.h.b16 %v224
    %v328 = vunpack.c.l.b16 %v225
    %v329 = vunpack.c.h.b16 %v225
    %v330 = vunpack.c.l.b16 %v226
    %v331 = vunpack.c.h.b16 %v226
    %v332 = vunpack.c.l.b16 %v227
    %v333 = vunpack.c.h.b16 %v227
    %v334 = vunpack.c.l.b16 %v228
    %v335 = vunpack.c.h.b16 %v228
    %v336 = vunpack.c.l.b16 %v229
    %v337 = vunpack.c.h.b16 %v229
    %v338 = vpack.c.b16 %v276, %v274
    %v339 = vpack.c.b16 %v277, %v275
    %v340 = vpack.c.b16 %v280, %v278
    %v341 = vpack.c.b16 %v281, %v279
    %v342 = vpack.c.b16 %v284, %v282
    %v343 = vpack.c.b16 %v285, %v283
    %v344 = vpack.c.b16 %v288, %v286
    %v345 = vpack.c.b16 %v289, %v287
    %v346 = vpack.c.b16 %v292, %v290
    %v347 = vpack.c.b16 %v293, %v291
    %v348 = vpack.c.b16 %v296, %v294
    %v349 = vpack.c.b16 %v297, %v295
    %v350 = vpack.c.b16 %v300, %v298
    %v351 = vpack.c.b16 %v301, %v299
    %v352 = vpack.c.b16 %v304, %v302
    %v353 = vpack.c.b16 %v305, %v303
    %v354 = vpack.c.b16 %v308, %v306
    %v355 = vpack.c.b16 %v309, %v307
    %v356 = vpack.c.b16 %v312, %v310
    %v357 = vpack.c.b16 %v313, %v311
    %v358 = vpack.c.b16 %v316, %v314
    %v359 = vpack.c.b16 %v317, %v315
    %v360 = vpack.c.b16 %v320, %v318
    %v361 = vpack.c.b16 %v321, %v319
    %v362 = vpack.c.b16 %v324, %v322
    %v363 = vpack.c.b16 %v325, %v323
    %v364 = vpack.c.b16 %v328, %v326
    %v365 = vpack.c.b16 %v329, %v327
    %v366 = vpack.c.b16 %v332, %v330
    %v367 = vpack.c.b16 %v333, %v331
    %v368 = vpack.c.b16 %v336, %v334
    %v369 = vpack.c.b16 %v337, %v335
    %402 = vmatprep.subr.bf16.mxu0 %v353
    %403 = vmatpush1.bf16.msra.mxu0 %v352
    %404 = vmatprep.subr.bf16.mxu0 %v351
    %405 = vmatpush1.bf16.msra.mxu0 %v350
    %406 = vmatprep.subr.bf16.mxu0 %v349
    %407 = vmatpush1.bf16.msra.mxu0 %v348
    %408 = vmatprep.subr.bf16.mxu0 %v347
    %409 = vmatpush1.bf16.msra.mxu0 %v346
    %410 = vmatprep.subr.bf16.mxu0 %v345
    %411 = vmatpush1.bf16.msra.mxu0 %v344
    %412 = vmatprep.subr.bf16.mxu0 %v343
    %413 = vmatpush1.bf16.msra.mxu0 %v342
    %414 = vmatprep.subr.bf16.mxu0 %v341
    %415 = vmatpush1.bf16.msra.mxu0 %v340
    %416 = vmatprep.subr.bf16.mxu0 %v339
    %417 = vmatpush1.bf16.msra.mxu0 %v338
    %418 = vmatprep.subr.bf16.mxu0 %v369
    %419 = vmatpush2.bf16.msra.mxu0 %v368
    %420 = vmatprep.subr.bf16.mxu0 %v367
    %421 = vmatpush2.bf16.msra.mxu0 %v366
    %422 = vmatprep.subr.bf16.mxu0 %v365
    %423 = vmatpush2.bf16.msra.mxu0 %v364
    %424 = vmatprep.subr.bf16.mxu0 %v363
    %425 = vmatpush2.bf16.msra.mxu0 %v362
    %426 = vmatprep.subr.bf16.mxu0 %v361
    %427 = vmatpush2.bf16.msra.mxu0 %v360
    %428 = vmatprep.subr.bf16.mxu0 %v359
    %429 = vmatpush2.bf16.msra.mxu0 %v358
    %430 = vmatprep.subr.bf16.mxu0 %v357
    %431 = vmatpush2.bf16.msra.mxu0 %v356
    %432 = vmatprep.subr.bf16.mxu0 %v355
    %433 = vmatpush2.bf16.msra.mxu0 %v354
    %434 = vmatprep.mubr.bf16.mxu0 %v167
    %435 = vmatmul.mubr.bf16.gmra.mxu0 %v166
    %v436 = vpop.f32.mrf.mxu0
    %v437 = vadd.f32 %v235, %v436
    %v438 = vpop.f32.mrf.mxu0
    %v439 = vadd.f32 %v239, %v438
    %v440 = vpop.f32.mrf.mxu0
    %v441 = vadd.f32 %v235, %v440
    %v442 = vpop.f32.mrf.mxu0
    %v443 = vadd.f32 %v239, %v442
    %444 = vmatprep.mubr.bf16.mxu0 %v169
    %445 = vmatmul.mubr.bf16.gmra.mxu0 %v168
    %v446 = vpop.f32.mrf.mxu0
    %v447 = vadd.f32 %v235, %v446
    %v448 = vpop.f32.mrf.mxu0
    %v449 = vadd.f32 %v239, %v448
    %v450 = vpop.f32.mrf.mxu0
    %v451 = vadd.f32 %v235, %v450
    %v452 = vpop.f32.mrf.mxu0
    %v453 = vadd.f32 %v239, %v452
    %454 = vmatprep.mubr.bf16.mxu0 %v171
    %455 = vmatmul.mubr.bf16.gmra.mxu0 %v170
    %v456 = vpop.f32.mrf.mxu0
    %v457 = vadd.f32 %v235, %v456
    %v458 = vpop.f32.mrf.mxu0
    %v459 = vadd.f32 %v239, %v458
    %v460 = vpop.f32.mrf.mxu0
    %v461 = vadd.f32 %v235, %v460
    %v462 = vpop.f32.mrf.mxu0
    %v463 = vadd.f32 %v239, %v462
    %464 = vmatprep.mubr.bf16.mxu0 %v173
    %465 = vmatmul.mubr.bf16.gmra.mxu0 %v172
    %v466 = vpop.f32.mrf.mxu0
    %v467 = vadd.f32 %v235, %v466
    %v468 = vpop.f32.mrf.mxu0
    %v469 = vadd.f32 %v239, %v468
    %v470 = vpop.f32.mrf.mxu0
    %v471 = vadd.f32 %v235, %v470
    %v472 = vpop.f32.mrf.mxu0
    %v473 = vadd.f32 %v239, %v472
    %474 = vmatprep.mubr.bf16.mxu0 %v175
    %475 = vmatmul.mubr.bf16.gmra.mxu0 %v174
    %v476 = vpop.f32.mrf.mxu0
    %v477 = vadd.f32 %v235, %v476
    %v478 = vpop.f32.mrf.mxu0
    %v479 = vadd.f32 %v239, %v478
    %v480 = vpop.f32.mrf.mxu0
    %v481 = vadd.f32 %v235, %v480
    %v482 = vpop.f32.mrf.mxu0
    %v483 = vadd.f32 %v239, %v482
    %484 = vmatprep.mubr.bf16.mxu0 %v177
    %485 = vmatmul.mubr.bf16.gmra.mxu0 %v176
    %v486 = vpop.f32.mrf.mxu0
    %v487 = vadd.f32 %v235, %v486
    %v488 = vpop.f32.mrf.mxu0
    %v489 = vadd.f32 %v239, %v488
    %v490 = vpop.f32.mrf.mxu0
    %v491 = vadd.f32 %v235, %v490
    %v492 = vpop.f32.mrf.mxu0
    %v493 = vadd.f32 %v239, %v492
    %494 = vmatprep.mubr.bf16.mxu0 %v179
    %495 = vmatmul.mubr.bf16.gmra.mxu0 %v178
    %v496 = vpop.f32.mrf.mxu0
    %v497 = vadd.f32 %v235, %v496
    %v498 = vpop.f32.mrf.mxu0
    %v499 = vadd.f32 %v239, %v498
    %v500 = vpop.f32.mrf.mxu0
    %v501 = vadd.f32 %v235, %v500
    %v502 = vpop.f32.mrf.mxu0
    %v503 = vadd.f32 %v239, %v502
    %504 = vmatprep.mubr.bf16.mxu0 %v181
    %505 = vmatmul.mubr.bf16.gmra.mxu0 %v180
    %v506 = vpop.f32.mrf.mxu0
    %v507 = vadd.f32 %v235, %v506
    %v508 = vpop.f32.mrf.mxu0
    %v509 = vadd.f32 %v239, %v508
    %v510 = vpop.f32.mrf.mxu0
    %v511 = vadd.f32 %v235, %v510
    %v512 = vpop.f32.mrf.mxu0
    %v513 = vadd.f32 %v239, %v512
    %514 = vmatprep.mubr.bf16.mxu0 %v183
    %515 = vmatmul.mubr.bf16.gmra.mxu0 %v182
    %v516 = vpop.f32.mrf.mxu0
    %v517 = vadd.f32 %v235, %v516
    %v518 = vpop.f32.mrf.mxu0
    %v519 = vadd.f32 %v239, %v518
    %v520 = vpop.f32.mrf.mxu0
    %v521 = vadd.f32 %v235, %v520
    %v522 = vpop.f32.mrf.mxu0
    %v523 = vadd.f32 %v239, %v522
    %524 = vmatprep.mubr.bf16.mxu0 %v185
    %525 = vmatmul.mubr.bf16.gmra.mxu0 %v184
    %v526 = vpop.f32.mrf.mxu0
    %v527 = vadd.f32 %v235, %v526
    %v528 = vpop.f32.mrf.mxu0
    %v529 = vadd.f32 %v239, %v528
    %v530 = vpop.f32.mrf.mxu0
    %v531 = vadd.f32 %v235, %v530
    %v532 = vpop.f32.mrf.mxu0
    %v533 = vadd.f32 %v239, %v532
    %534 = vmatprep.mubr.bf16.mxu0 %v187
    %535 = vmatmul.mubr.bf16.gmra.mxu0 %v186
    %v536 = vpop.f32.mrf.mxu0
    %v537 = vadd.f32 %v235, %v536
    %v538 = vpop.f32.mrf.mxu0
    %v539 = vadd.f32 %v239, %v538
    %v540 = vpop.f32.mrf.mxu0
    %v541 = vadd.f32 %v235, %v540
    %v542 = vpop.f32.mrf.mxu0
    %v543 = vadd.f32 %v239, %v542
    %544 = vmatprep.mubr.bf16.mxu0 %v189
    %545 = vmatmul.mubr.bf16.gmra.mxu0 %v188
    %v546 = vpop.f32.mrf.mxu0
    %v547 = vadd.f32 %v235, %v546
    %v548 = vpop.f32.mrf.mxu0
    %v549 = vadd.f32 %v239, %v548
    %v550 = vpop.f32.mrf.mxu0
    %v551 = vadd.f32 %v235, %v550
    %v552 = vpop.f32.mrf.mxu0
    %v553 = vadd.f32 %v239, %v552
    %554 = vmatprep.mubr.bf16.mxu0 %v191
    %555 = vmatmul.mubr.bf16.gmra.mxu0 %v190
    %v556 = vpop.f32.mrf.mxu0
    %v557 = vadd.f32 %v235, %v556
    %v558 = vpop.f32.mrf.mxu0
    %v559 = vadd.f32 %v239, %v558
    %v560 = vpop.f32.mrf.mxu0
    %v561 = vadd.f32 %v235, %v560
    %v562 = vpop.f32.mrf.mxu0
    %v563 = vadd.f32 %v239, %v562
    %564 = vmatprep.mubr.bf16.mxu0 %v193
    %565 = vmatmul.mubr.bf16.gmra.mxu0 %v192
    %v566 = vpop.f32.mrf.mxu0
    %v567 = vadd.f32 %v235, %v566
    %v568 = vpop.f32.mrf.mxu0
    %v569 = vadd.f32 %v239, %v568
    %v570 = vpop.f32.mrf.mxu0
    %v571 = vadd.f32 %v235, %v570
    %v572 = vpop.f32.mrf.mxu0
    %v573 = vadd.f32 %v239, %v572
    %574 = vmatprep.mubr.bf16.mxu0 %v195
    %575 = vmatmul.mubr.bf16.gmra.mxu0 %v194
    %v576 = vpop.f32.mrf.mxu0
    %v577 = vadd.f32 %v235, %v576
    %v578 = vpop.f32.mrf.mxu0
    %v579 = vadd.f32 %v239, %v578
    %v580 = vpop.f32.mrf.mxu0
    %v581 = vadd.f32 %v235, %v580
    %v582 = vpop.f32.mrf.mxu0
    %v583 = vadd.f32 %v239, %v582
    %584 = vmatprep.mubr.bf16.mxu0 %v197
    %585 = vmatmul.mubr.bf16.gmra.mxu0 %v196
    %v586 = vpop.f32.mrf.mxu0
    %v587 = vadd.f32 %v235, %v586
    %v588 = vpop.f32.mrf.mxu0
    %v589 = vadd.f32 %v239, %v588
    %v590 = vpop.f32.mrf.mxu0
    %v591 = vadd.f32 %v235, %v590
    %v592 = vpop.f32.mrf.mxu0
    %v593 = vadd.f32 %v239, %v592
    %594 = vdwg.mxu0
    %v595 = vpack.c.bf16 %v441, %v437
    %v596 = vpack.c.bf16 %v443, %v439
    %v597 = vpack.c.bf16 %v451, %v447
    %v598 = vpack.c.bf16 %v453, %v449
    %v599 = vpack.c.bf16 %v461, %v457
    %v600 = vpack.c.bf16 %v463, %v459
    %v601 = vpack.c.bf16 %v471, %v467
    %v602 = vpack.c.bf16 %v473, %v469
    %v603 = vpack.c.bf16 %v481, %v477
    %v604 = vpack.c.bf16 %v483, %v479
    %v605 = vpack.c.bf16 %v491, %v487
    %v606 = vpack.c.bf16 %v493, %v489
    %v607 = vpack.c.bf16 %v501, %v497
    %v608 = vpack.c.bf16 %v503, %v499
    %v609 = vpack.c.bf16 %v511, %v507
    %v610 = vpack.c.bf16 %v513, %v509
    %v611 = vpack.c.bf16 %v521, %v517
    %v612 = vpack.c.bf16 %v523, %v519
    %v613 = vpack.c.bf16 %v531, %v527
    %v614 = vpack.c.bf16 %v533, %v529
    %v615 = vpack.c.bf16 %v541, %v537
    %v616 = vpack.c.bf16 %v543, %v539
    %v617 = vpack.c.bf16 %v551, %v547
    %v618 = vpack.c.bf16 %v553, %v549
    %v619 = vpack.c.bf16 %v561, %v557
    %v620 = vpack.c.bf16 %v563, %v559
    %v621 = vpack.c.bf16 %v571, %v567
    %v622 = vpack.c.bf16 %v573, %v569
    %v623 = vpack.c.bf16 %v581, %v577
    %v624 = vpack.c.bf16 %v583, %v579
    %v625 = vpack.c.bf16 %v591, %v587
    %v626 = vpack.c.bf16 %v593, %v589
    %v627 = vld [vmem:[#allocation7] sm:$0xff]
    %v628 = vld [vmem:[#allocation7 + $0x8] sm:$0xff]
    %v629 = vld [vmem:[#allocation7 + $0x10] sm:$0xff]
    %v630 = vld [vmem:[#allocation7 + $0x18] sm:$0xff]
    %v631 = vld [vmem:[#allocation7 + $0x20] sm:$0xff]
    %v632 = vld [vmem:[#allocation7 + $0x28] sm:$0xff]
    %v633 = vld [vmem:[#allocation7 + $0x30] sm:$0xff]
    %v634 = vld [vmem:[#allocation7 + $0x38] sm:$0xff]
    %v635 = vld [vmem:[#allocation7 + $0x40] sm:$0xff]
    %v636 = vld [vmem:[#allocation7 + $0x48] sm:$0xff]
    %v637 = vld [vmem:[#allocation7 + $0x50] sm:$0xff]
    %v638 = vld [vmem:[#allocation7 + $0x58] sm:$0xff]
    %v639 = vld [vmem:[#allocation7 + $0x60] sm:$0xff]
    %v640 = vld [vmem:[#allocation7 + $0x68] sm:$0xff]
    %v641 = vld [vmem:[#allocation7 + $0x70] sm:$0xff]
    %v642 = vld [vmem:[#allocation7 + $0x78] sm:$0xff]
    %v643 = vld [vmem:[#allocation7 + $0x80] sm:$0xff]
    %v644 = vld [vmem:[#allocation7 + $0x88] sm:$0xff]
    %v645 = vld [vmem:[#allocation7 + $0x90] sm:$0xff]
    %v646 = vld [vmem:[#allocation7 + $0x98] sm:$0xff]
    %v647 = vld [vmem:[#allocation7 + $0xa0] sm:$0xff]
    %v648 = vld [vmem:[#allocation7 + $0xa8] sm:$0xff]
    %v649 = vld [vmem:[#allocation7 + $0xb0] sm:$0xff]
    %v650 = vld [vmem:[#allocation7 + $0xb8] sm:$0xff]
    %v651 = vld [vmem:[#allocation7 + $0xc0] sm:$0xff]
    %v652 = vld [vmem:[#allocation7 + $0xc8] sm:$0xff]
    %v653 = vld [vmem:[#allocation7 + $0xd0] sm:$0xff]
    %v654 = vld [vmem:[#allocation7 + $0xd8] sm:$0xff]
    %v655 = vld [vmem:[#allocation7 + $0xe0] sm:$0xff]
    %v656 = vld [vmem:[#allocation7 + $0xe8] sm:$0xff]
    %v657 = vld [vmem:[#allocation7 + $0xf0] sm:$0xff]
    %v658 = vld [vmem:[#allocation7 + $0xf8] sm:$0xff]
    %v659 = vld [vmem:[%s4] sm:$0x3]
    %v661 = vlaneseq
    %v662 = vshrl.u32 %v661, 7
    %v663 = vsub.s32 0, %v662
    %v664 = vrot.slane %v659, %v663
    %v665 = vlaneseq
    %v666 = vshrl.u32 %v665, 7
    %v667 = vsub.s32 1, %v666
    %v668 = vrot.slane %v659, %v667
    %v703 = vunpack.c.l.b16 %v627
    %v704 = vunpack.c.h.b16 %v627
    %v705 = vunpack.c.l.b16 %v628
    %v706 = vunpack.c.h.b16 %v628
    %v707 = vunpack.c.l.b16 %v629
    %v708 = vunpack.c.h.b16 %v629
    %v709 = vunpack.c.l.b16 %v630
    %v710 = vunpack.c.h.b16 %v630
    %v711 = vunpack.c.l.b16 %v631
    %v712 = vunpack.c.h.b16 %v631
    %v713 = vunpack.c.l.b16 %v632
    %v714 = vunpack.c.h.b16 %v632
    %v715 = vunpack.c.l.b16 %v633
    %v716 = vunpack.c.h.b16 %v633
    %v717 = vunpack.c.l.b16 %v634
    %v718 = vunpack.c.h.b16 %v634
    %v719 = vunpack.c.l.b16 %v635
    %v720 = vunpack.c.h.b16 %v635
    %v721 = vunpack.c.l.b16 %v636
    %v722 = vunpack.c.h.b16 %v636
    %v723 = vunpack.c.l.b16 %v637
    %v724 = vunpack.c.h.b16 %v637
    %v725 = vunpack.c.l.b16 %v638
    %v726 = vunpack.c.h.b16 %v638
    %v727 = vunpack.c.l.b16 %v639
    %v728 = vunpack.c.h.b16 %v639
    %v729 = vunpack.c.l.b16 %v640
    %v730 = vunpack.c.h.b16 %v640
    %v731 = vunpack.c.l.b16 %v641
    %v732 = vunpack.c.h.b16 %v641
    %v733 = vunpack.c.l.b16 %v642
    %v734 = vunpack.c.h.b16 %v642
    %v735 = vunpack.c.l.b16 %v643
    %v736 = vunpack.c.h.b16 %v643
    %v737 = vunpack.c.l.b16 %v644
    %v738 = vunpack.c.h.b16 %v644
    %v739 = vunpack.c.l.b16 %v645
    %v740 = vunpack.c.h.b16 %v645
    %v741 = vunpack.c.l.b16 %v646
    %v742 = vunpack.c.h.b16 %v646
    %v743 = vunpack.c.l.b16 %v647
    %v744 = vunpack.c.h.b16 %v647
    %v745 = vunpack.c.l.b16 %v648
    %v746 = vunpack.c.h.b16 %v648
    %v747 = vunpack.c.l.b16 %v649
    %v748 = vunpack.c.h.b16 %v649
    %v749 = vunpack.c.l.b16 %v650
    %v750 = vunpack.c.h.b16 %v650
    %v751 = vunpack.c.l.b16 %v651
    %v752 = vunpack.c.h.b16 %v651
    %v753 = vunpack.c.l.b16 %v652
    %v754 = vunpack.c.h.b16 %v652
    %v755 = vunpack.c.l.b16 %v653
    %v756 = vunpack.c.h.b16 %v653
    %v757 = vunpack.c.l.b16 %v654
    %v758 = vunpack.c.h.b16 %v654
    %v759 = vunpack.c.l.b16 %v655
    %v760 = vunpack.c.h.b16 %v655
    %v761 = vunpack.c.l.b16 %v656
    %v762 = vunpack.c.h.b16 %v656
    %v763 = vunpack.c.l.b16 %v657
    %v764 = vunpack.c.h.b16 %v657
    %v765 = vunpack.c.l.b16 %v658
    %v766 = vunpack.c.h.b16 %v658
    %v767 = vpack.c.b16 %v705, %v703
    %v768 = vpack.c.b16 %v706, %v704
    %v769 = vpack.c.b16 %v709, %v707
    %v770 = vpack.c.b16 %v710, %v708
    %v771 = vpack.c.b16 %v713, %v711
    %v772 = vpack.c.b16 %v714, %v712
    %v773 = vpack.c.b16 %v717, %v715
    %v774 = vpack.c.b16 %v718, %v716
    %v775 = vpack.c.b16 %v721, %v719
    %v776 = vpack.c.b16 %v722, %v720
    %v777 = vpack.c.b16 %v725, %v723
    %v778 = vpack.c.b16 %v726, %v724
    %v779 = vpack.c.b16 %v729, %v727
    %v780 = vpack.c.b16 %v730, %v728
    %v781 = vpack.c.b16 %v733, %v731
    %v782 = vpack.c.b16 %v734, %v732
    %v783 = vpack.c.b16 %v737, %v735
    %v784 = vpack.c.b16 %v738, %v736
    %v785 = vpack.c.b16 %v741, %v739
    %v786 = vpack.c.b16 %v742, %v740
    %v787 = vpack.c.b16 %v745, %v743
    %v788 = vpack.c.b16 %v746, %v744
    %v789 = vpack.c.b16 %v749, %v747
    %v790 = vpack.c.b16 %v750, %v748
    %v791 = vpack.c.b16 %v753, %v751
    %v792 = vpack.c.b16 %v754, %v752
    %v793 = vpack.c.b16 %v757, %v755
    %v794 = vpack.c.b16 %v758, %v756
    %v795 = vpack.c.b16 %v761, %v759
    %v796 = vpack.c.b16 %v762, %v760
    %v797 = vpack.c.b16 %v765, %v763
    %v798 = vpack.c.b16 %v766, %v764
    %831 = vmatprep.subr.bf16.mxu0 %v782
    %832 = vmatpush1.bf16.msra.mxu0 %v781
    %833 = vmatprep.subr.bf16.mxu0 %v780
    %834 = vmatpush1.bf16.msra.mxu0 %v779
    %835 = vmatprep.subr.bf16.mxu0 %v778
    %836 = vmatpush1.bf16.msra.mxu0 %v777
    %837 = vmatprep.subr.bf16.mxu0 %v776
    %838 = vmatpush1.bf16.msra.mxu0 %v775
    %839 = vmatprep.subr.bf16.mxu0 %v774
    %840 = vmatpush1.bf16.msra.mxu0 %v773
    %841 = vmatprep.subr.bf16.mxu0 %v772
    %842 = vmatpush1.bf16.msra.mxu0 %v771
    %843 = vmatprep.subr.bf16.mxu0 %v770
    %844 = vmatpush1.bf16.msra.mxu0 %v769
    %845 = vmatprep.subr.bf16.mxu0 %v768
    %846 = vmatpush1.bf16.msra.mxu0 %v767
    %847 = vmatprep.subr.bf16.mxu0 %v798
    %848 = vmatpush2.bf16.msra.mxu0 %v797
    %849 = vmatprep.subr.bf16.mxu0 %v796
    %850 = vmatpush2.bf16.msra.mxu0 %v795
    %851 = vmatprep.subr.bf16.mxu0 %v794
    %852 = vmatpush2.bf16.msra.mxu0 %v793
    %853 = vmatprep.subr.bf16.mxu0 %v792
    %854 = vmatpush2.bf16.msra.mxu0 %v791
    %855 = vmatprep.subr.bf16.mxu0 %v790
    %856 = vmatpush2.bf16.msra.mxu0 %v789
    %857 = vmatprep.subr.bf16.mxu0 %v788
    %858 = vmatpush2.bf16.msra.mxu0 %v787
    %859 = vmatprep.subr.bf16.mxu0 %v786
    %860 = vmatpush2.bf16.msra.mxu0 %v785
    %861 = vmatprep.subr.bf16.mxu0 %v784
    %862 = vmatpush2.bf16.msra.mxu0 %v783
    %863 = vmatprep.mubr.bf16.mxu0 %v596
    %864 = vmatmul.mubr.bf16.gmra.mxu0 %v595
    %v865 = vpop.f32.mrf.mxu0
    %v866 = vadd.f32 %v664, %v865
    %v867 = vpop.f32.mrf.mxu0
    %v868 = vadd.f32 %v668, %v867
    %v869 = vpop.f32.mrf.mxu0
    %v870 = vadd.f32 %v664, %v869
    %v871 = vpop.f32.mrf.mxu0
    %v872 = vadd.f32 %v668, %v871
    %873 = vmatprep.mubr.bf16.mxu0 %v598
    %874 = vmatmul.mubr.bf16.gmra.mxu0 %v597
    %v875 = vpop.f32.mrf.mxu0
    %v876 = vadd.f32 %v664, %v875
    %v877 = vpop.f32.mrf.mxu0
    %v878 = vadd.f32 %v668, %v877
    %v879 = vpop.f32.mrf.mxu0
    %v880 = vadd.f32 %v664, %v879
    %v881 = vpop.f32.mrf.mxu0
    %v882 = vadd.f32 %v668, %v881
    %883 = vmatprep.mubr.bf16.mxu0 %v600
    %884 = vmatmul.mubr.bf16.gmra.mxu0 %v599
    %v885 = vpop.f32.mrf.mxu0
    %v886 = vadd.f32 %v664, %v885
    %v887 = vpop.f32.mrf.mxu0
    %v888 = vadd.f32 %v668, %v887
    %v889 = vpop.f32.mrf.mxu0
    %v890 = vadd.f32 %v664, %v889
    %v891 = vpop.f32.mrf.mxu0
    %v892 = vadd.f32 %v668, %v891
    %893 = vmatprep.mubr.bf16.mxu0 %v602
    %894 = vmatmul.mubr.bf16.gmra.mxu0 %v601
    %v895 = vpop.f32.mrf.mxu0
    %v896 = vadd.f32 %v664, %v895
    %v897 = vpop.f32.mrf.mxu0
    %v898 = vadd.f32 %v668, %v897
    %v899 = vpop.f32.mrf.mxu0
    %v900 = vadd.f32 %v664, %v899
    %v901 = vpop.f32.mrf.mxu0
    %v902 = vadd.f32 %v668, %v901
    %903 = vmatprep.mubr.bf16.mxu0 %v604
    %904 = vmatmul.mubr.bf16.gmra.mxu0 %v603
    %v905 = vpop.f32.mrf.mxu0
    %v906 = vadd.f32 %v664, %v905
    %v907 = vpop.f32.mrf.mxu0
    %v908 = vadd.f32 %v668, %v907
    %v909 = vpop.f32.mrf.mxu0
    %v910 = vadd.f32 %v664, %v909
    %v911 = vpop.f32.mrf.mxu0
    %v912 = vadd.f32 %v668, %v911
    %913 = vmatprep.mubr.bf16.mxu0 %v606
    %914 = vmatmul.mubr.bf16.gmra.mxu0 %v605
    %v915 = vpop.f32.mrf.mxu0
    %v916 = vadd.f32 %v664, %v915
    %v917 = vpop.f32.mrf.mxu0
    %v918 = vadd.f32 %v668, %v917
    %v919 = vpop.f32.mrf.mxu0
    %v920 = vadd.f32 %v664, %v919
    %v921 = vpop.f32.mrf.mxu0
    %v922 = vadd.f32 %v668, %v921
    %923 = vmatprep.mubr.bf16.mxu0 %v608
    %924 = vmatmul.mubr.bf16.gmra.mxu0 %v607
    %v925 = vpop.f32.mrf.mxu0
    %v926 = vadd.f32 %v664, %v925
    %v927 = vpop.f32.mrf.mxu0
    %v928 = vadd.f32 %v668, %v927
    %v929 = vpop.f32.mrf.mxu0
    %v930 = vadd.f32 %v664, %v929
    %v931 = vpop.f32.mrf.mxu0
    %v932 = vadd.f32 %v668, %v931
    %933 = vmatprep.mubr.bf16.mxu0 %v610
    %934 = vmatmul.mubr.bf16.gmra.mxu0 %v609
    %v935 = vpop.f32.mrf.mxu0
    %v936 = vadd.f32 %v664, %v935
    %v937 = vpop.f32.mrf.mxu0
    %v938 = vadd.f32 %v668, %v937
    %v939 = vpop.f32.mrf.mxu0
    %v940 = vadd.f32 %v664, %v939
    %v941 = vpop.f32.mrf.mxu0
    %v942 = vadd.f32 %v668, %v941
    %943 = vmatprep.mubr.bf16.mxu0 %v612
    %944 = vmatmul.mubr.bf16.gmra.mxu0 %v611
    %v945 = vpop.f32.mrf.mxu0
    %v946 = vadd.f32 %v664, %v945
    %v947 = vpop.f32.mrf.mxu0
    %v948 = vadd.f32 %v668, %v947
    %v949 = vpop.f32.mrf.mxu0
    %v950 = vadd.f32 %v664, %v949
    %v951 = vpop.f32.mrf.mxu0
    %v952 = vadd.f32 %v668, %v951
    %953 = vmatprep.mubr.bf16.mxu0 %v614
    %954 = vmatmul.mubr.bf16.gmra.mxu0 %v613
    %v955 = vpop.f32.mrf.mxu0
    %v956 = vadd.f32 %v664, %v955
    %v957 = vpop.f32.mrf.mxu0
    %v958 = vadd.f32 %v668, %v957
    %v959 = vpop.f32.mrf.mxu0
    %v960 = vadd.f32 %v664, %v959
    %v961 = vpop.f32.mrf.mxu0
    %v962 = vadd.f32 %v668, %v961
    %963 = vmatprep.mubr.bf16.mxu0 %v616
    %964 = vmatmul.mubr.bf16.gmra.mxu0 %v615
    %v965 = vpop.f32.mrf.mxu0
    %v966 = vadd.f32 %v664, %v965
    %v967 = vpop.f32.mrf.mxu0
    %v968 = vadd.f32 %v668, %v967
    %v969 = vpop.f32.mrf.mxu0
    %v970 = vadd.f32 %v664, %v969
    %v971 = vpop.f32.mrf.mxu0
    %v972 = vadd.f32 %v668, %v971
    %973 = vmatprep.mubr.bf16.mxu0 %v618
    %974 = vmatmul.mubr.bf16.gmra.mxu0 %v617
    %v975 = vpop.f32.mrf.mxu0
    %v976 = vadd.f32 %v664, %v975
    %v977 = vpop.f32.mrf.mxu0
    %v978 = vadd.f32 %v668, %v977
    %v979 = vpop.f32.mrf.mxu0
    %v980 = vadd.f32 %v664, %v979
    %v981 = vpop.f32.mrf.mxu0
    %v982 = vadd.f32 %v668, %v981
    %983 = vmatprep.mubr.bf16.mxu0 %v620
    %984 = vmatmul.mubr.bf16.gmra.mxu0 %v619
    %v985 = vpop.f32.mrf.mxu0
    %v986 = vadd.f32 %v664, %v985
    %v987 = vpop.f32.mrf.mxu0
    %v988 = vadd.f32 %v668, %v987
    %v989 = vpop.f32.mrf.mxu0
    %v990 = vadd.f32 %v664, %v989
    %v991 = vpop.f32.mrf.mxu0
    %v992 = vadd.f32 %v668, %v991
    %993 = vmatprep.mubr.bf16.mxu0 %v622
    %994 = vmatmul.mubr.bf16.gmra.mxu0 %v621
    %v995 = vpop.f32.mrf.mxu0
    %v996 = vadd.f32 %v664, %v995
    %v997 = vpop.f32.mrf.mxu0
    %v998 = vadd.f32 %v668, %v997
    %v999 = vpop.f32.mrf.mxu0
    %v1000 = vadd.f32 %v664, %v999
    %v1001 = vpop.f32.mrf.mxu0
    %v1002 = vadd.f32 %v668, %v1001
    %1003 = vmatprep.mubr.bf16.mxu0 %v624
    %1004 = vmatmul.mubr.bf16.gmra.mxu0 %v623
    %v1005 = vpop.f32.mrf.mxu0
    %v1006 = vadd.f32 %v664, %v1005
    %v1007 = vpop.f32.mrf.mxu0
    %v1008 = vadd.f32 %v668, %v1007
    %v1009 = vpop.f32.mrf.mxu0
    %v1010 = vadd.f32 %v664, %v1009
    %v1011 = vpop.f32.mrf.mxu0
    %v1012 = vadd.f32 %v668, %v1011
    %1013 = vmatprep.mubr.bf16.mxu0 %v626
    %1014 = vmatmul.mubr.bf16.gmra.mxu0 %v625
    %v1015 = vpop.f32.mrf.mxu0
    %v1016 = vadd.f32 %v664, %v1015
    %v1017 = vpop.f32.mrf.mxu0
    %v1018 = vadd.f32 %v668, %v1017
    %v1019 = vpop.f32.mrf.mxu0
    %v1020 = vadd.f32 %v664, %v1019
    %v1021 = vpop.f32.mrf.mxu0
    %v1022 = vadd.f32 %v668, %v1021
    %1023 = vdwg.mxu0
    %v1024 = vpack.c.bf16 %v870, %v866
    %v1025 = vpack.c.bf16 %v872, %v868
    %v1026 = vpack.c.bf16 %v880, %v876
    %v1027 = vpack.c.bf16 %v882, %v878
    %v1028 = vpack.c.bf16 %v890, %v886
    %v1029 = vpack.c.bf16 %v892, %v888
    %v1030 = vpack.c.bf16 %v900, %v896
    %v1031 = vpack.c.bf16 %v902, %v898
    %v1032 = vpack.c.bf16 %v910, %v906
    %v1033 = vpack.c.bf16 %v912, %v908
    %v1034 = vpack.c.bf16 %v920, %v916
    %v1035 = vpack.c.bf16 %v922, %v918
    %v1036 = vpack.c.bf16 %v930, %v926
    %v1037 = vpack.c.bf16 %v932, %v928
    %v1038 = vpack.c.bf16 %v940, %v936
    %v1039 = vpack.c.bf16 %v942, %v938
    %v1040 = vpack.c.bf16 %v950, %v946
    %v1041 = vpack.c.bf16 %v952, %v948
    %v1042 = vpack.c.bf16 %v960, %v956
    %v1043 = vpack.c.bf16 %v962, %v958
    %v1044 = vpack.c.bf16 %v970, %v966
    %v1045 = vpack.c.bf16 %v972, %v968
    %v1046 = vpack.c.bf16 %v980, %v976
    %v1047 = vpack.c.bf16 %v982, %v978
    %v1048 = vpack.c.bf16 %v990, %v986
    %v1049 = vpack.c.bf16 %v992, %v988
    %v1050 = vpack.c.bf16 %v1000, %v996
    %v1051 = vpack.c.bf16 %v1002, %v998
    %v1052 = vpack.c.bf16 %v1010, %v1006
    %v1053 = vpack.c.bf16 %v1012, %v1008
    %v1054 = vpack.c.bf16 %v1020, %v1016
    %v1055 = vpack.c.bf16 %v1022, %v1018
    %v1056 = vld [vmem:[#allocation8] sm:$0xff]
    %v1057 = vld [vmem:[#allocation8 + $0x8] sm:$0xff]
    %v1058 = vld [vmem:[#allocation8 + $0x10] sm:$0xff]
    %v1059 = vld [vmem:[#allocation8 + $0x18] sm:$0xff]
    %v1060 = vld [vmem:[#allocation8 + $0x20] sm:$0xff]
    %v1061 = vld [vmem:[#allocation8 + $0x28] sm:$0xff]
    %v1062 = vld [vmem:[#allocation8 + $0x30] sm:$0xff]
    %v1063 = vld [vmem:[#allocation8 + $0x38] sm:$0xff]
    %v1064 = vld [vmem:[#allocation8 + $0x40] sm:$0xff]
    %v1065 = vld [vmem:[#allocation8 + $0x48] sm:$0xff]
    %v1066 = vld [vmem:[#allocation8 + $0x50] sm:$0xff]
    %v1067 = vld [vmem:[#allocation8 + $0x58] sm:$0xff]
    %v1068 = vld [vmem:[#allocation8 + $0x60] sm:$0xff]
    %v1069 = vld [vmem:[#allocation8 + $0x68] sm:$0xff]
    %v1070 = vld [vmem:[#allocation8 + $0x70] sm:$0xff]
    %v1071 = vld [vmem:[#allocation8 + $0x78] sm:$0xff]
    %v1072 = vld [vmem:[#allocation8 + $0x80] sm:$0xff]
    %v1073 = vld [vmem:[#allocation8 + $0x88] sm:$0xff]
    %v1074 = vld [vmem:[#allocation8 + $0x90] sm:$0xff]
    %v1075 = vld [vmem:[#allocation8 + $0x98] sm:$0xff]
    %v1076 = vld [vmem:[#allocation8 + $0xa0] sm:$0xff]
    %v1077 = vld [vmem:[#allocation8 + $0xa8] sm:$0xff]
    %v1078 = vld [vmem:[#allocation8 + $0xb0] sm:$0xff]
    %v1079 = vld [vmem:[#allocation8 + $0xb8] sm:$0xff]
    %v1080 = vld [vmem:[#allocation8 + $0xc0] sm:$0xff]
    %v1081 = vld [vmem:[#allocation8 + $0xc8] sm:$0xff]
    %v1082 = vld [vmem:[#allocation8 + $0xd0] sm:$0xff]
    %v1083 = vld [vmem:[#allocation8 + $0xd8] sm:$0xff]
    %v1084 = vld [vmem:[#allocation8 + $0xe0] sm:$0xff]
    %v1085 = vld [vmem:[#allocation8 + $0xe8] sm:$0xff]
    %v1086 = vld [vmem:[#allocation8 + $0xf0] sm:$0xff]
    %v1087 = vld [vmem:[#allocation8 + $0xf8] sm:$0xff]
    %v1088 = vld [vmem:[%s6] sm:$0x3]
    %v1090 = vlaneseq
    %v1091 = vshrl.u32 %v1090, 7
    %v1092 = vsub.s32 0, %v1091
    %v1093 = vrot.slane %v1088, %v1092
    %v1094 = vlaneseq
    %v1095 = vshrl.u32 %v1094, 7
    %v1096 = vsub.s32 1, %v1095
    %v1097 = vrot.slane %v1088, %v1096
    %v1132 = vunpack.c.l.b16 %v1056
    %v1133 = vunpack.c.h.b16 %v1056
    %v1134 = vunpack.c.l.b16 %v1057
    %v1135 = vunpack.c.h.b16 %v1057
    %v1136 = vunpack.c.l.b16 %v1058
    %v1137 = vunpack.c.h.b16 %v1058
    %v1138 = vunpack.c.l.b16 %v1059
    %v1139 = vunpack.c.h.b16 %v1059
    %v1140 = vunpack.c.l.b16 %v1060
    %v1141 = vunpack.c.h.b16 %v1060
    %v1142 = vunpack.c.l.b16 %v1061
    %v1143 = vunpack.c.h.b16 %v1061
    %v1144 = vunpack.c.l.b16 %v1062
    %v1145 = vunpack.c.h.b16 %v1062
    %v1146 = vunpack.c.l.b16 %v1063
    %v1147 = vunpack.c.h.b16 %v1063
    %v1148 = vunpack.c.l.b16 %v1064
    %v1149 = vunpack.c.h.b16 %v1064
    %v1150 = vunpack.c.l.b16 %v1065
    %v1151 = vunpack.c.h.b16 %v1065
    %v1152 = vunpack.c.l.b16 %v1066
    %v1153 = vunpack.c.h.b16 %v1066
    %v1154 = vunpack.c.l.b16 %v1067
    %v1155 = vunpack.c.h.b16 %v1067
    %v1156 = vunpack.c.l.b16 %v1068
    %v1157 = vunpack.c.h.b16 %v1068
    %v1158 = vunpack.c.l.b16 %v1069
    %v1159 = vunpack.c.h.b16 %v1069
    %v1160 = vunpack.c.l.b16 %v1070
    %v1161 = vunpack.c.h.b16 %v1070
    %v1162 = vunpack.c.l.b16 %v1071
    %v1163 = vunpack.c.h.b16 %v1071
    %v1164 = vunpack.c.l.b16 %v1072
    %v1165 = vunpack.c.h.b16 %v1072
    %v1166 = vunpack.c.l.b16 %v1073
    %v1167 = vunpack.c.h.b16 %v1073
    %v1168 = vunpack.c.l.b16 %v1074
    %v1169 = vunpack.c.h.b16 %v1074
    %v1170 = vunpack.c.l.b16 %v1075
    %v1171 = vunpack.c.h.b16 %v1075
    %v1172 = vunpack.c.l.b16 %v1076
    %v1173 = vunpack.c.h.b16 %v1076
    %v1174 = vunpack.c.l.b16 %v1077
    %v1175 = vunpack.c.h.b16 %v1077
    %v1176 = vunpack.c.l.b16 %v1078
    %v1177 = vunpack.c.h.b16 %v1078
    %v1178 = vunpack.c.l.b16 %v1079
    %v1179 = vunpack.c.h.b16 %v1079
    %v1180 = vunpack.c.l.b16 %v1080
    %v1181 = vunpack.c.h.b16 %v1080
    %v1182 = vunpack.c.l.b16 %v1081
    %v1183 = vunpack.c.h.b16 %v1081
    %v1184 = vunpack.c.l.b16 %v1082
    %v1185 = vunpack.c.h.b16 %v1082
    %v1186 = vunpack.c.l.b16 %v1083
    %v1187 = vunpack.c.h.b16 %v1083
    %v1188 = vunpack.c.l.b16 %v1084
    %v1189 = vunpack.c.h.b16 %v1084
    %v1190 = vunpack.c.l.b16 %v1085
    %v1191 = vunpack.c.h.b16 %v1085
    %v1192 = vunpack.c.l.b16 %v1086
    %v1193 = vunpack.c.h.b16 %v1086
    %v1194 = vunpack.c.l.b16 %v1087
    %v1195 = vunpack.c.h.b16 %v1087
    %v1196 = vpack.c.b16 %v1134, %v1132
    %v1197 = vpack.c.b16 %v1135, %v1133
    %v1198 = vpack.c.b16 %v1138, %v1136
    %v1199 = vpack.c.b16 %v1139, %v1137
    %v1200 = vpack.c.b16 %v1142, %v1140
    %v1201 = vpack.c.b16 %v1143, %v1141
    %v1202 = vpack.c.b16 %v1146, %v1144
    %v1203 = vpack.c.b16 %v1147, %v1145
    %v1204 = vpack.c.b16 %v1150, %v1148
    %v1205 = vpack.c.b16 %v1151, %v1149
    %v1206 = vpack.c.b16 %v1154, %v1152
    %v1207 = vpack.c.b16 %v1155, %v1153
    %v1208 = vpack.c.b16 %v1158, %v1156
    %v1209 = vpack.c.b16 %v1159, %v1157
    %v1210 = vpack.c.b16 %v1162, %v1160
    %v1211 = vpack.c.b16 %v1163, %v1161
    %v1212 = vpack.c.b16 %v1166, %v1164
    %v1213 = vpack.c.b16 %v1167, %v1165
    %v1214 = vpack.c.b16 %v1170, %v1168
    %v1215 = vpack.c.b16 %v1171, %v1169
    %v1216 = vpack.c.b16 %v1174, %v1172
    %v1217 = vpack.c.b16 %v1175, %v1173
    %v1218 = vpack.c.b16 %v1178, %v1176
    %v1219 = vpack.c.b16 %v1179, %v1177
    %v1220 = vpack.c.b16 %v1182, %v1180
    %v1221 = vpack.c.b16 %v1183, %v1181
    %v1222 = vpack.c.b16 %v1186, %v1184
    %v1223 = vpack.c.b16 %v1187, %v1185
    %v1224 = vpack.c.b16 %v1190, %v1188
    %v1225 = vpack.c.b16 %v1191, %v1189
    %v1226 = vpack.c.b16 %v1194, %v1192
    %v1227 = vpack.c.b16 %v1195, %v1193
    %1260 = vmatprep.subr.bf16.mxu0 %v1211
    %1261 = vmatpush1.bf16.msra.mxu0 %v1210
    %1262 = vmatprep.subr.bf16.mxu0 %v1209
    %1263 = vmatpush1.bf16.msra.mxu0 %v1208
    %1264 = vmatprep.subr.bf16.mxu0 %v1207
    %1265 = vmatpush1.bf16.msra.mxu0 %v1206
    %1266 = vmatprep.subr.bf16.mxu0 %v1205
    %1267 = vmatpush1.bf16.msra.mxu0 %v1204
    %1268 = vmatprep.subr.bf16.mxu0 %v1203
    %1269 = vmatpush1.bf16.msra.mxu0 %v1202
    %1270 = vmatprep.subr.bf16.mxu0 %v1201
    %1271 = vmatpush1.bf16.msra.mxu0 %v1200
    %1272 = vmatprep.subr.bf16.mxu0 %v1199
    %1273 = vmatpush1.bf16.msra.mxu0 %v1198
    %1274 = vmatprep.subr.bf16.mxu0 %v1197
    %1275 = vmatpush1.bf16.msra.mxu0 %v1196
    %1276 = vmatprep.subr.bf16.mxu0 %v1227
    %1277 = vmatpush2.bf16.msra.mxu0 %v1226
    %1278 = vmatprep.subr.bf16.mxu0 %v1225
    %1279 = vmatpush2.bf16.msra.mxu0 %v1224
    %1280 = vmatprep.subr.bf16.mxu0 %v1223
    %1281 = vmatpush2.bf16.msra.mxu0 %v1222
    %1282 = vmatprep.subr.bf16.mxu0 %v1221
    %1283 = vmatpush2.bf16.msra.mxu0 %v1220
    %1284 = vmatprep.subr.bf16.mxu0 %v1219
    %1285 = vmatpush2.bf16.msra.mxu0 %v1218
    %1286 = vmatprep.subr.bf16.mxu0 %v1217
    %1287 = vmatpush2.bf16.msra.mxu0 %v1216
    %1288 = vmatprep.subr.bf16.mxu0 %v1215
    %1289 = vmatpush2.bf16.msra.mxu0 %v1214
    %1290 = vmatprep.subr.bf16.mxu0 %v1213
    %1291 = vmatpush2.bf16.msra.mxu0 %v1212
    %1292 = vmatprep.mubr.bf16.mxu0 %v1025
    %1293 = vmatmul.mubr.bf16.gmra.mxu0 %v1024
    %v1294 = vpop.f32.mrf.mxu0
    %v1295 = vadd.f32 %v1093, %v1294
    %v1296 = vpop.f32.mrf.mxu0
    %v1297 = vadd.f32 %v1097, %v1296
    %v1298 = vpop.f32.mrf.mxu0
    %v1299 = vadd.f32 %v1093, %v1298
    %v1300 = vpop.f32.mrf.mxu0
    %v1301 = vadd.f32 %v1097, %v1300
    %1302 = vmatprep.mubr.bf16.mxu0 %v1027
    %1303 = vmatmul.mubr.bf16.gmra.mxu0 %v1026
    %v1304 = vpop.f32.mrf.mxu0
    %v1305 = vadd.f32 %v1093, %v1304
    %v1306 = vpop.f32.mrf.mxu0
    %v1307 = vadd.f32 %v1097, %v1306
    %v1308 = vpop.f32.mrf.mxu0
    %v1309 = vadd.f32 %v1093, %v1308
    %v1310 = vpop.f32.mrf.mxu0
    %v1311 = vadd.f32 %v1097, %v1310
    %1312 = vmatprep.mubr.bf16.mxu0 %v1029
    %1313 = vmatmul.mubr.bf16.gmra.mxu0 %v1028
    %v1314 = vpop.f32.mrf.mxu0
    %v1315 = vadd.f32 %v1093, %v1314
    %v1316 = vpop.f32.mrf.mxu0
    %v1317 = vadd.f32 %v1097, %v1316
    %v1318 = vpop.f32.mrf.mxu0
    %v1319 = vadd.f32 %v1093, %v1318
    %v1320 = vpop.f32.mrf.mxu0
    %v1321 = vadd.f32 %v1097, %v1320
    %1322 = vmatprep.mubr.bf16.mxu0 %v1031
    %1323 = vmatmul.mubr.bf16.gmra.mxu0 %v1030
    %v1324 = vpop.f32.mrf.mxu0
    %v1325 = vadd.f32 %v1093, %v1324
    %v1326 = vpop.f32.mrf.mxu0
    %v1327 = vadd.f32 %v1097, %v1326
    %v1328 = vpop.f32.mrf.mxu0
    %v1329 = vadd.f32 %v1093, %v1328
    %v1330 = vpop.f32.mrf.mxu0
    %v1331 = vadd.f32 %v1097, %v1330
    %1332 = vmatprep.mubr.bf16.mxu0 %v1033
    %1333 = vmatmul.mubr.bf16.gmra.mxu0 %v1032
    %v1334 = vpop.f32.mrf.mxu0
    %v1335 = vadd.f32 %v1093, %v1334
    %v1336 = vpop.f32.mrf.mxu0
    %v1337 = vadd.f32 %v1097, %v1336
    %v1338 = vpop.f32.mrf.mxu0
    %v1339 = vadd.f32 %v1093, %v1338
    %v1340 = vpop.f32.mrf.mxu0
    %v1341 = vadd.f32 %v1097, %v1340
    %1342 = vmatprep.mubr.bf16.mxu0 %v1035
    %1343 = vmatmul.mubr.bf16.gmra.mxu0 %v1034
    %v1344 = vpop.f32.mrf.mxu0
    %v1345 = vadd.f32 %v1093, %v1344
    %v1346 = vpop.f32.mrf.mxu0
    %v1347 = vadd.f32 %v1097, %v1346
    %v1348 = vpop.f32.mrf.mxu0
    %v1349 = vadd.f32 %v1093, %v1348
    %v1350 = vpop.f32.mrf.mxu0
    %v1351 = vadd.f32 %v1097, %v1350
    %1352 = vmatprep.mubr.bf16.mxu0 %v1037
    %1353 = vmatmul.mubr.bf16.gmra.mxu0 %v1036
    %v1354 = vpop.f32.mrf.mxu0
    %v1355 = vadd.f32 %v1093, %v1354
    %v1356 = vpop.f32.mrf.mxu0
    %v1357 = vadd.f32 %v1097, %v1356
    %v1358 = vpop.f32.mrf.mxu0
    %v1359 = vadd.f32 %v1093, %v1358
    %v1360 = vpop.f32.mrf.mxu0
    %v1361 = vadd.f32 %v1097, %v1360
    %1362 = vmatprep.mubr.bf16.mxu0 %v1039
    %1363 = vmatmul.mubr.bf16.gmra.mxu0 %v1038
    %v1364 = vpop.f32.mrf.mxu0
    %v1365 = vadd.f32 %v1093, %v1364
    %v1366 = vpop.f32.mrf.mxu0
    %v1367 = vadd.f32 %v1097, %v1366
    %v1368 = vpop.f32.mrf.mxu0
    %v1369 = vadd.f32 %v1093, %v1368
    %v1370 = vpop.f32.mrf.mxu0
    %v1371 = vadd.f32 %v1097, %v1370
    %1372 = vmatprep.mubr.bf16.mxu0 %v1041
    %1373 = vmatmul.mubr.bf16.gmra.mxu0 %v1040
    %v1374 = vpop.f32.mrf.mxu0
    %v1375 = vadd.f32 %v1093, %v1374
    %v1376 = vpop.f32.mrf.mxu0
    %v1377 = vadd.f32 %v1097, %v1376
    %v1378 = vpop.f32.mrf.mxu0
    %v1379 = vadd.f32 %v1093, %v1378
    %v1380 = vpop.f32.mrf.mxu0
    %v1381 = vadd.f32 %v1097, %v1380
    %1382 = vmatprep.mubr.bf16.mxu0 %v1043
    %1383 = vmatmul.mubr.bf16.gmra.mxu0 %v1042
    %v1384 = vpop.f32.mrf.mxu0
    %v1385 = vadd.f32 %v1093, %v1384
    %v1386 = vpop.f32.mrf.mxu0
    %v1387 = vadd.f32 %v1097, %v1386
    %v1388 = vpop.f32.mrf.mxu0
    %v1389 = vadd.f32 %v1093, %v1388
    %v1390 = vpop.f32.mrf.mxu0
    %v1391 = vadd.f32 %v1097, %v1390
    %1392 = vmatprep.mubr.bf16.mxu0 %v1045
    %1393 = vmatmul.mubr.bf16.gmra.mxu0 %v1044
    %v1394 = vpop.f32.mrf.mxu0
    %v1395 = vadd.f32 %v1093, %v1394
    %v1396 = vpop.f32.mrf.mxu0
    %v1397 = vadd.f32 %v1097, %v1396
    %v1398 = vpop.f32.mrf.mxu0
    %v1399 = vadd.f32 %v1093, %v1398
    %v1400 = vpop.f32.mrf.mxu0
    %v1401 = vadd.f32 %v1097, %v1400
    %1402 = vmatprep.mubr.bf16.mxu0 %v1047
    %1403 = vmatmul.mubr.bf16.gmra.mxu0 %v1046
    %v1404 = vpop.f32.mrf.mxu0
    %v1405 = vadd.f32 %v1093, %v1404
    %v1406 = vpop.f32.mrf.mxu0
    %v1407 = vadd.f32 %v1097, %v1406
    %v1408 = vpop.f32.mrf.mxu0
    %v1409 = vadd.f32 %v1093, %v1408
    %v1410 = vpop.f32.mrf.mxu0
    %v1411 = vadd.f32 %v1097, %v1410
    %1412 = vmatprep.mubr.bf16.mxu0 %v1049
    %1413 = vmatmul.mubr.bf16.gmra.mxu0 %v1048
    %v1414 = vpop.f32.mrf.mxu0
    %v1415 = vadd.f32 %v1093, %v1414
    %v1416 = vpop.f32.mrf.mxu0
    %v1417 = vadd.f32 %v1097, %v1416
    %v1418 = vpop.f32.mrf.mxu0
    %v1419 = vadd.f32 %v1093, %v1418
    %v1420 = vpop.f32.mrf.mxu0
    %v1421 = vadd.f32 %v1097, %v1420
    %1422 = vmatprep.mubr.bf16.mxu0 %v1051
    %1423 = vmatmul.mubr.bf16.gmra.mxu0 %v1050
    %v1424 = vpop.f32.mrf.mxu0
    %v1425 = vadd.f32 %v1093, %v1424
    %v1426 = vpop.f32.mrf.mxu0
    %v1427 = vadd.f32 %v1097, %v1426
    %v1428 = vpop.f32.mrf.mxu0
    %v1429 = vadd.f32 %v1093, %v1428
    %v1430 = vpop.f32.mrf.mxu0
    %v1431 = vadd.f32 %v1097, %v1430
    %1432 = vmatprep.mubr.bf16.mxu0 %v1053
    %1433 = vmatmul.mubr.bf16.gmra.mxu0 %v1052
    %v1434 = vpop.f32.mrf.mxu0
    %v1435 = vadd.f32 %v1093, %v1434
    %v1436 = vpop.f32.mrf.mxu0
    %v1437 = vadd.f32 %v1097, %v1436
    %v1438 = vpop.f32.mrf.mxu0
    %v1439 = vadd.f32 %v1093, %v1438
    %v1440 = vpop.f32.mrf.mxu0
    %v1441 = vadd.f32 %v1097, %v1440
    %1442 = vmatprep.mubr.bf16.mxu0 %v1055
    %1443 = vmatmul.mubr.bf16.gmra.mxu0 %v1054
    %v1444 = vpop.f32.mrf.mxu0
    %v1445 = vadd.f32 %v1093, %v1444
    %v1446 = vpop.f32.mrf.mxu0
    %v1447 = vadd.f32 %v1097, %v1446
    %v1448 = vpop.f32.mrf.mxu0
    %v1449 = vadd.f32 %v1093, %v1448
    %v1450 = vpop.f32.mrf.mxu0
    %v1451 = vadd.f32 %v1097, %v1450
    %1452 = vdwg.mxu0
    %v1453 = vpack.c.bf16 %v1299, %v1295
    %v1454 = vpack.c.bf16 %v1301, %v1297
    %v1455 = vpack.c.bf16 %v1309, %v1305
    %v1456 = vpack.c.bf16 %v1311, %v1307
    %v1457 = vpack.c.bf16 %v1319, %v1315
    %v1458 = vpack.c.bf16 %v1321, %v1317
    %v1459 = vpack.c.bf16 %v1329, %v1325
    %v1460 = vpack.c.bf16 %v1331, %v1327
    %v1461 = vpack.c.bf16 %v1339, %v1335
    %v1462 = vpack.c.bf16 %v1341, %v1337
    %v1463 = vpack.c.bf16 %v1349, %v1345
    %v1464 = vpack.c.bf16 %v1351, %v1347
    %v1465 = vpack.c.bf16 %v1359, %v1355
    %v1466 = vpack.c.bf16 %v1361, %v1357
    %v1467 = vpack.c.bf16 %v1369, %v1365
    %v1468 = vpack.c.bf16 %v1371, %v1367
    %v1469 = vpack.c.bf16 %v1379, %v1375
    %v1470 = vpack.c.bf16 %v1381, %v1377
    %v1471 = vpack.c.bf16 %v1389, %v1385
    %v1472 = vpack.c.bf16 %v1391, %v1387
    %v1473 = vpack.c.bf16 %v1399, %v1395
    %v1474 = vpack.c.bf16 %v1401, %v1397
    %v1475 = vpack.c.bf16 %v1409, %v1405
    %v1476 = vpack.c.bf16 %v1411, %v1407
    %v1477 = vpack.c.bf16 %v1419, %v1415
    %v1478 = vpack.c.bf16 %v1421, %v1417
    %v1479 = vpack.c.bf16 %v1429, %v1425
    %v1480 = vpack.c.bf16 %v1431, %v1427
    %v1481 = vpack.c.bf16 %v1439, %v1435
    %v1482 = vpack.c.bf16 %v1441, %v1437
    %v1483 = vpack.c.bf16 %v1449, %v1445
    %v1484 = vpack.c.bf16 %v1451, %v1447
    %v1485 = vld [vmem:[#allocation10] sm:$0xf]
    %v1486 = vld [vmem:[#allocation10 + $0x4] sm:$0xf]
    %v1487 = vld [vmem:[#allocation10 + $0x8] sm:$0xf]
    %v1488 = vld [vmem:[#allocation10 + $0xc] sm:$0xf]
    %v1489 = vld [vmem:[#allocation10 + $0x10] sm:$0xf]
    %v1490 = vld [vmem:[#allocation10 + $0x14] sm:$0xf]
    %v1491 = vld [vmem:[#allocation10 + $0x18] sm:$0xf]
    %v1492 = vld [vmem:[#allocation10 + $0x1c] sm:$0xf]
    %v1493 = vld [vmem:[#allocation10 + $0x20] sm:$0xf]
    %v1494 = vld [vmem:[#allocation10 + $0x24] sm:$0xf]
    %v1495 = vld [vmem:[#allocation10 + $0x28] sm:$0xf]
    %v1496 = vld [vmem:[#allocation10 + $0x2c] sm:$0xf]
    %v1497 = vld [vmem:[#allocation10 + $0x30] sm:$0xf]
    %v1498 = vld [vmem:[#allocation10 + $0x34] sm:$0xf]
    %v1499 = vld [vmem:[#allocation10 + $0x38] sm:$0xf]
    %v1500 = vld [vmem:[#allocation10 + $0x3c] sm:$0xf]
    %v1501 = vld [vmem:[#allocation10 + $0x40] sm:$0xf]
    %v1502 = vld [vmem:[#allocation10 + $0x44] sm:$0xf]
    %v1503 = vld [vmem:[#allocation10 + $0x48] sm:$0xf]
    %v1504 = vld [vmem:[#allocation10 + $0x4c] sm:$0xf]
    %v1505 = vld [vmem:[#allocation10 + $0x50] sm:$0xf]
    %v1506 = vld [vmem:[#allocation10 + $0x54] sm:$0xf]
    %v1507 = vld [vmem:[#allocation10 + $0x58] sm:$0xf]
    %v1508 = vld [vmem:[#allocation10 + $0x5c] sm:$0xf]
    %v1509 = vld [vmem:[#allocation10 + $0x60] sm:$0xf]
    %v1510 = vld [vmem:[#allocation10 + $0x64] sm:$0xf]
    %v1511 = vld [vmem:[#allocation10 + $0x68] sm:$0xf]
    %v1512 = vld [vmem:[#allocation10 + $0x6c] sm:$0xf]
    %v1513 = vld [vmem:[#allocation10 + $0x70] sm:$0xf]
    %v1514 = vld [vmem:[#allocation10 + $0x74] sm:$0xf]
    %v1515 = vld [vmem:[#allocation10 + $0x78] sm:$0xf]
    %v1516 = vld [vmem:[#allocation10 + $0x7c] sm:$0xf]
    %v1517 = vld [vmem:[%s8] sm:$0x1]
    %v1519 = vlaneseq
    %v1520 = vshrl.u32 %v1519, 7
    %v1521 = vsub.s32 0, %v1520
    %v1522 = vrot.slane %v1517, %v1521
    %v1556 = vunpack.c.l.b16 %v1485
    %v1557 = vunpack.c.l.b16 %v1486
    %v1558 = vunpack.c.l.b16 %v1487
    %v1559 = vunpack.c.l.b16 %v1488
    %v1560 = vunpack.c.l.b16 %v1489
    %v1561 = vunpack.c.l.b16 %v1490
    %v1562 = vunpack.c.l.b16 %v1491
    %v1563 = vunpack.c.l.b16 %v1492
    %v1564 = vunpack.c.l.b16 %v1493
    %v1565 = vunpack.c.l.b16 %v1494
    %v1566 = vunpack.c.l.b16 %v1495
    %v1567 = vunpack.c.l.b16 %v1496
    %v1568 = vunpack.c.l.b16 %v1497
    %v1569 = vunpack.c.l.b16 %v1498
    %v1570 = vunpack.c.l.b16 %v1499
    %v1571 = vunpack.c.l.b16 %v1500
    %v1572 = vunpack.c.l.b16 %v1501
    %v1573 = vunpack.c.l.b16 %v1502
    %v1574 = vunpack.c.l.b16 %v1503
    %v1575 = vunpack.c.l.b16 %v1504
    %v1576 = vunpack.c.l.b16 %v1505
    %v1577 = vunpack.c.l.b16 %v1506
    %v1578 = vunpack.c.l.b16 %v1507
    %v1579 = vunpack.c.l.b16 %v1508
    %v1580 = vunpack.c.l.b16 %v1509
    %v1581 = vunpack.c.l.b16 %v1510
    %v1582 = vunpack.c.l.b16 %v1511
    %v1583 = vunpack.c.l.b16 %v1512
    %v1584 = vunpack.c.l.b16 %v1513
    %v1585 = vunpack.c.l.b16 %v1514
    %v1586 = vunpack.c.l.b16 %v1515
    %v1587 = vunpack.c.l.b16 %v1516
    %v1588 = vpack.c.b16 %v1557, %v1556
    %v1589 = vpack.c.b16 %v1559, %v1558
    %v1590 = vpack.c.b16 %v1561, %v1560
    %v1591 = vpack.c.b16 %v1563, %v1562
    %v1592 = vpack.c.b16 %v1565, %v1564
    %v1593 = vpack.c.b16 %v1567, %v1566
    %v1594 = vpack.c.b16 %v1569, %v1568
    %v1595 = vpack.c.b16 %v1571, %v1570
    %v1596 = vpack.c.b16 %v1573, %v1572
    %v1597 = vpack.c.b16 %v1575, %v1574
    %v1598 = vpack.c.b16 %v1577, %v1576
    %v1599 = vpack.c.b16 %v1579, %v1578
    %v1600 = vpack.c.b16 %v1581, %v1580
    %v1601 = vpack.c.b16 %v1583, %v1582
    %v1602 = vpack.c.b16 %v1585, %v1584
    %v1603 = vpack.c.b16 %v1587, %v1586
    %1620 = vmatprep.subr.bf16.mxu0 0
    %1621 = vmatpush1.bf16.msra.mxu0 %v1595
    %1622 = vmatprep.subr.bf16.mxu0 0
    %1623 = vmatpush1.bf16.msra.mxu0 %v1594
    %1624 = vmatprep.subr.bf16.mxu0 0
    %1625 = vmatpush1.bf16.msra.mxu0 %v1593
    %1626 = vmatprep.subr.bf16.mxu0 0
    %1627 = vmatpush1.bf16.msra.mxu0 %v1592
    %1628 = vmatprep.subr.bf16.mxu0 0
    %1629 = vmatpush1.bf16.msra.mxu0 %v1591
    %1630 = vmatprep.subr.bf16.mxu0 0
    %1631 = vmatpush1.bf16.msra.mxu0 %v1590
    %1632 = vmatprep.subr.bf16.mxu0 0
    %1633 = vmatpush1.bf16.msra.mxu0 %v1589
    %1634 = vmatprep.subr.bf16.mxu0 0
    %1635 = vmatpush1.bf16.msra.mxu0 %v1588
    %1636 = vmatprep.subr.bf16.mxu0 0
    %1637 = vmatpush2.bf16.msra.mxu0 %v1603
    %1638 = vmatprep.subr.bf16.mxu0 0
    %1639 = vmatpush2.bf16.msra.mxu0 %v1602
    %1640 = vmatprep.subr.bf16.mxu0 0
    %1641 = vmatpush2.bf16.msra.mxu0 %v1601
    %1642 = vmatprep.subr.bf16.mxu0 0
    %1643 = vmatpush2.bf16.msra.mxu0 %v1600
    %1644 = vmatprep.subr.bf16.mxu0 0
    %1645 = vmatpush2.bf16.msra.mxu0 %v1599
    %1646 = vmatprep.subr.bf16.mxu0 0
    %1647 = vmatpush2.bf16.msra.mxu0 %v1598
    %1648 = vmatprep.subr.bf16.mxu0 0
    %1649 = vmatpush2.bf16.msra.mxu0 %v1597
    %1650 = vmatprep.subr.bf16.mxu0 0
    %1651 = vmatpush2.bf16.msra.mxu0 %v1596
    %1652 = vmatprep.mubr.bf16.mxu0 %v1454
    %1653 = vmatmul.mubr.bf16.gmra.mxu0 %v1453
    %v1654 = vpop.f32.mrf.mxu0
    %v1655 = vadd.f32 %v1522, %v1654
    %v1656 = vpop.f32.mrf.mxu0
    %v1657 = vpop.f32.mrf.mxu0
    %v1658 = vadd.f32 %v1522, %v1657
    %v1659 = vpop.f32.mrf.mxu0
    %1660 = vmatprep.mubr.bf16.mxu0 %v1456
    %1661 = vmatmul.mubr.bf16.gmra.mxu0 %v1455
    %v1662 = vpop.f32.mrf.mxu0
    %v1663 = vadd.f32 %v1522, %v1662
    %v1664 = vpop.f32.mrf.mxu0
    %v1665 = vpop.f32.mrf.mxu0
    %v1666 = vadd.f32 %v1522, %v1665
    %v1667 = vpop.f32.mrf.mxu0
    %1668 = vmatprep.mubr.bf16.mxu0 %v1458
    %1669 = vmatmul.mubr.bf16.gmra.mxu0 %v1457
    %v1670 = vpop.f32.mrf.mxu0
    %v1671 = vadd.f32 %v1522, %v1670
    %v1672 = vpop.f32.mrf.mxu0
    %v1673 = vpop.f32.mrf.mxu0
    %v1674 = vadd.f32 %v1522, %v1673
    %v1675 = vpop.f32.mrf.mxu0
    %1676 = vmatprep.mubr.bf16.mxu0 %v1460
    %1677 = vmatmul.mubr.bf16.gmra.mxu0 %v1459
    %v1678 = vpop.f32.mrf.mxu0
    %v1679 = vadd.f32 %v1522, %v1678
    %v1680 = vpop.f32.mrf.mxu0
    %v1681 = vpop.f32.mrf.mxu0
    %v1682 = vadd.f32 %v1522, %v1681
    %v1683 = vpop.f32.mrf.mxu0
    %1684 = vmatprep.mubr.bf16.mxu0 %v1462
    %1685 = vmatmul.mubr.bf16.gmra.mxu0 %v1461
    %v1686 = vpop.f32.mrf.mxu0
    %v1687 = vadd.f32 %v1522, %v1686
    %v1688 = vpop.f32.mrf.mxu0
    %v1689 = vpop.f32.mrf.mxu0
    %v1690 = vadd.f32 %v1522, %v1689
    %v1691 = vpop.f32.mrf.mxu0
    %1692 = vmatprep.mubr.bf16.mxu0 %v1464
    %1693 = vmatmul.mubr.bf16.gmra.mxu0 %v1463
    %v1694 = vpop.f32.mrf.mxu0
    %v1695 = vadd.f32 %v1522, %v1694
    %v1696 = vpop.f32.mrf.mxu0
    %v1697 = vpop.f32.mrf.mxu0
    %v1698 = vadd.f32 %v1522, %v1697
    %v1699 = vpop.f32.mrf.mxu0
    %1700 = vmatprep.mubr.bf16.mxu0 %v1466
    %1701 = vmatmul.mubr.bf16.gmra.mxu0 %v1465
    %v1702 = vpop.f32.mrf.mxu0
    %v1703 = vadd.f32 %v1522, %v1702
    %v1704 = vpop.f32.mrf.mxu0
    %v1705 = vpop.f32.mrf.mxu0
    %v1706 = vadd.f32 %v1522, %v1705
    %v1707 = vpop.f32.mrf.mxu0
    %1708 = vmatprep.mubr.bf16.mxu0 %v1468
    %1709 = vmatmul.mubr.bf16.gmra.mxu0 %v1467
    %v1710 = vpop.f32.mrf.mxu0
    %v1711 = vadd.f32 %v1522, %v1710
    %v1712 = vpop.f32.mrf.mxu0
    %v1713 = vpop.f32.mrf.mxu0
    %v1714 = vadd.f32 %v1522, %v1713
    %v1715 = vpop.f32.mrf.mxu0
    %1716 = vmatprep.mubr.bf16.mxu0 %v1470
    %1717 = vmatmul.mubr.bf16.gmra.mxu0 %v1469
    %v1718 = vpop.f32.mrf.mxu0
    %v1719 = vadd.f32 %v1522, %v1718
    %v1720 = vpop.f32.mrf.mxu0
    %v1721 = vpop.f32.mrf.mxu0
    %v1722 = vadd.f32 %v1522, %v1721
    %v1723 = vpop.f32.mrf.mxu0
    %1724 = vmatprep.mubr.bf16.mxu0 %v1472
    %1725 = vmatmul.mubr.bf16.gmra.mxu0 %v1471
    %v1726 = vpop.f32.mrf.mxu0
    %v1727 = vadd.f32 %v1522, %v1726
    %v1728 = vpop.f32.mrf.mxu0
    %v1729 = vpop.f32.mrf.mxu0
    %v1730 = vadd.f32 %v1522, %v1729
    %v1731 = vpop.f32.mrf.mxu0
    %1732 = vmatprep.mubr.bf16.mxu0 %v1474
    %1733 = vmatmul.mubr.bf16.gmra.mxu0 %v1473
    %v1734 = vpop.f32.mrf.mxu0
    %v1735 = vadd.f32 %v1522, %v1734
    %v1736 = vpop.f32.mrf.mxu0
    %v1737 = vpop.f32.mrf.mxu0
    %v1738 = vadd.f32 %v1522, %v1737
    %v1739 = vpop.f32.mrf.mxu0
    %1740 = vmatprep.mubr.bf16.mxu0 %v1476
    %1741 = vmatmul.mubr.bf16.gmra.mxu0 %v1475
    %v1742 = vpop.f32.mrf.mxu0
    %v1743 = vadd.f32 %v1522, %v1742
    %v1744 = vpop.f32.mrf.mxu0
    %v1745 = vpop.f32.mrf.mxu0
    %v1746 = vadd.f32 %v1522, %v1745
    %v1747 = vpop.f32.mrf.mxu0
    %1748 = vmatprep.mubr.bf16.mxu0 %v1478
    %1749 = vmatmul.mubr.bf16.gmra.mxu0 %v1477
    %v1750 = vpop.f32.mrf.mxu0
    %v1751 = vadd.f32 %v1522, %v1750
    %v1752 = vpop.f32.mrf.mxu0
    %v1753 = vpop.f32.mrf.mxu0
    %v1754 = vadd.f32 %v1522, %v1753
    %v1755 = vpop.f32.mrf.mxu0
    %1756 = vmatprep.mubr.bf16.mxu0 %v1480
    %1757 = vmatmul.mubr.bf16.gmra.mxu0 %v1479
    %v1758 = vpop.f32.mrf.mxu0
    %v1759 = vadd.f32 %v1522, %v1758
    %v1760 = vpop.f32.mrf.mxu0
    %v1761 = vpop.f32.mrf.mxu0
    %v1762 = vadd.f32 %v1522, %v1761
    %v1763 = vpop.f32.mrf.mxu0
    %1764 = vmatprep.mubr.bf16.mxu0 %v1482
    %1765 = vmatmul.mubr.bf16.gmra.mxu0 %v1481
    %v1766 = vpop.f32.mrf.mxu0
    %v1767 = vadd.f32 %v1522, %v1766
    %v1768 = vpop.f32.mrf.mxu0
    %v1769 = vpop.f32.mrf.mxu0
    %v1770 = vadd.f32 %v1522, %v1769
    %v1771 = vpop.f32.mrf.mxu0
    %1772 = vmatprep.mubr.bf16.mxu0 %v1484
    %1773 = vmatmul.mubr.bf16.gmra.mxu0 %v1483
    %v1774 = vpop.f32.mrf.mxu0
    %v1775 = vadd.f32 %v1522, %v1774
    %v1776 = vpop.f32.mrf.mxu0
    %v1777 = vpop.f32.mrf.mxu0
    %v1778 = vadd.f32 %v1522, %v1777
    %v1779 = vpop.f32.mrf.mxu0
    %1780 = vdwg.mxu0
    %1781 = vst [vmem:[#allocation11] sm:$0xff] %v1655
    %1782 = vst [vmem:[#allocation11 + $0x8] sm:$0xff] %v1658
    %1783 = vst [vmem:[#allocation11 + $0x10] sm:$0xff] %v1663
    %1784 = vst [vmem:[#allocation11 + $0x18] sm:$0xff] %v1666
    %1785 = vst [vmem:[#allocation11 + $0x20] sm:$0xff] %v1671
    %1786 = vst [vmem:[#allocation11 + $0x28] sm:$0xff] %v1674
    %1787 = vst [vmem:[#allocation11 + $0x30] sm:$0xff] %v1679
    %1788 = vst [vmem:[#allocation11 + $0x38] sm:$0xff] %v1682
    %1789 = vst [vmem:[#allocation11 + $0x40] sm:$0xff] %v1687
    %1790 = vst [vmem:[#allocation11 + $0x48] sm:$0xff] %v1690
    %1791 = vst [vmem:[#allocation11 + $0x50] sm:$0xff] %v1695
    %1792 = vst [vmem:[#allocation11 + $0x58] sm:$0xff] %v1698
    %1793 = vst [vmem:[#allocation11 + $0x60] sm:$0xff] %v1703
    %1794 = vst [vmem:[#allocation11 + $0x68] sm:$0xff] %v1706
    %1795 = vst [vmem:[#allocation11 + $0x70] sm:$0xff] %v1711
    %1796 = vst [vmem:[#allocation11 + $0x78] sm:$0xff] %v1714
    %1797 = vst [vmem:[#allocation11 + $0x80] sm:$0xff] %v1719
    %1798 = vst [vmem:[#allocation11 + $0x88] sm:$0xff] %v1722
    %1799 = vst [vmem:[#allocation11 + $0x90] sm:$0xff] %v1727
    %1800 = vst [vmem:[#allocation11 + $0x98] sm:$0xff] %v1730
    %1801 = vst [vmem:[#allocation11 + $0xa0] sm:$0xff] %v1735
    %1802 = vst [vmem:[#allocation11 + $0xa8] sm:$0xff] %v1738
    %1803 = vst [vmem:[#allocation11 + $0xb0] sm:$0xff] %v1743
    %1804 = vst [vmem:[#allocation11 + $0xb8] sm:$0xff] %v1746
    %1805 = vst [vmem:[#allocation11 + $0xc0] sm:$0xff] %v1751
    %1806 = vst [vmem:[#allocation11 + $0xc8] sm:$0xff] %v1754
    %1807 = vst [vmem:[#allocation11 + $0xd0] sm:$0xff] %v1759
    %1808 = vst [vmem:[#allocation11 + $0xd8] sm:$0xff] %v1762
    %1809 = vst [vmem:[#allocation11 + $0xe0] sm:$0xff] %v1767
    %1810 = vst [vmem:[#allocation11 + $0xe8] sm:$0xff] %v1770
    %1811 = vst [vmem:[#allocation11 + $0xf0] sm:$0xff] %v1775
    %1812 = vst [vmem:[#allocation11 + $0xf8] sm:$0xff] %v1778
    // Predicated region
    $region58: #{basic_mlp.1} parent=1 // pred_check
      _
    $region59: #{basic_mlp.1} parent=1 // pred_check_branch
      %1814 = sbr.rel (0) target = $region61
    $region60: #{basic_mlp.1} parent=1 // pred_region
      %s1816 = ssub.s32 4096, 4096
      %1817 = vsyncadd [#allocation4], %s1816
      %s1818 = sshll.u32 [#allocation11], 4
      %s1819 = int_to_ptr.vmem [resolvable:$true] %s1818
      %1824 = dma.vmem_to_hbm [thread:$0]  %s1819, 4096, %s9, [#allocation4], 128, 128, 8
    $region61: #{basic_mlp.1} parent=1 // pred_fallthru
      _
    // Predicated region
    $region62: #{basic_mlp.1} parent=1 // pred_check
      _
    $region63: #{basic_mlp.1} parent=1 // pred_check_branch
      %1826 = sbr.rel (0) target = $region65
    $region64: #{basic_mlp.1} parent=1 // pred_region
      %1827 = dma.done [#allocation4], 4096
    $region65: #{basic_mlp.1} parent=1 // pred_fallthru
      _
    %1828 = vsyncpa [#allocation3], 1
    %1829 = vsyncpa [#allocation6], 1
    %1830 = vsyncpa [#allocation9], 1
    %1831 = vsyncpa [#allocation4], 1

</llo_original>
